<compile_context>
chip_gen: v5e
topology: v5e:2x2
jax: 0.10.0
libtpu: 0.0.40
codegen_flags: <defaults>
</compile_context>

<pallas_src>
import math
from functools import partial

import numpy as np
import jax
import jax.numpy as jnp
from jax.experimental import pallas as pl
from jax.experimental.pallas import tpu as pltpu

# ---- model hyperparameters (PKANet defaults: emb_dim=64, num_heads=4) ----
EMB_DIM = 64
D_MODEL = EMB_DIM * 2            # 128 (attention / embedding width, "ninp")
NUM_HEADS = 4
HEAD_DIM = D_MODEL // NUM_HEADS  # 32
VOCAB = (100, 120, 50)           # vocab_size; logits have VOCAB[2] entries
OUT_PAD = 128                    # lane-dense padded logits width (>= VOCAB[2])
EMB_ROWS = 128                   # every vocab table row-padded to 128 rows
SEL_ROWS = 8                     # max admissions per patient (sublane-padded)
NINP = float(D_MODEL)            # reference multiplies embeddings by ninp (not sqrt)


# ---------------------------------------------------------------------------
# Fused kernel: embedding means + 3x MHA (last-query) + 2-layer output head.
# ---------------------------------------------------------------------------
def _make_kernel(n_adm):
    t = n_adm
    D = D_MODEL
    dh = HEAD_DIM

    def kernel(sel_ref, emb_ref, w_ref, b_ref, head_w_hbm,
               out_ref, head_w_vmem, head_sem):
        # -- overlap the output-head weight DMA with all of the compute below --
        head_cp = pltpu.make_async_copy(head_w_hbm, head_w_vmem, head_sem)
        head_cp.start()

        # -- embedding lookup + masked mean as (selection @ table) MXU matmuls --
        pe_row = b_ref[0, :, 4 * D:5 * D]                          # (1,D): PE row 0
        x1 = jnp.dot(sel_ref[0], emb_ref[0], preferred_element_type=jnp.float32)
        x2 = jnp.dot(sel_ref[1], emb_ref[1], preferred_element_type=jnp.float32)
        x3 = jnp.dot(sel_ref[2], emb_ref[2], preferred_element_type=jnp.float32)
        i1 = x1[0:t] * NINP + pe_row                               # (t,D) diag means
        i2 = x2[0:t] * NINP + pe_row                               # (t,D) proc means
        pm = x3[0:1]                                               # (1,D) med mean (no PE)

        def attn_last(x, b):
            """MHA output for the LAST query position only -> (1, D)."""
            n = x.shape[0]
            bias = b_ref[b]                                        # (1,5D) f32
            # fused lane-dense QKV projection; 1/sqrt(dh) folded into Wq/bq
            qkv = (jnp.dot(x.astype(jnp.bfloat16), w_ref[b, :, 0:3 * D],
                           preferred_element_type=jnp.float32)
                   + bias[:, 0:3 * D])                             # (n,3D) f32
            k_t = qkv[:, D:2 * D].T                                # (D,n): one transpose
            q_last = qkv[n - 1:n, 0:D]                             # (1,D)
            out = bias[:, 3 * D:4 * D]                             # (1,D) W_o bias
            for h in range(NUM_HEADS):                             # static 4-way unroll
                qh = q_last[:, h * dh:(h + 1) * dh]                # (1,dh)
                kth = k_t[h * dh:(h + 1) * dh, :]                  # (dh,n) sublane slice
                vh = qkv[:, 2 * D + h * dh:2 * D + (h + 1) * dh]   # (n,dh)
                s = jnp.dot(qh, kth, preferred_element_type=jnp.float32)   # (1,n)
                e = jnp.exp(s - jnp.max(s, axis=-1, keepdims=True))
                p = e * pl.reciprocal(jnp.sum(e, axis=-1, keepdims=True),
                                      approx=True)                 # softmax (EUP)
                hv = jnp.dot(p, vh, preferred_element_type=jnp.float32)    # (1,dh)
                # accumulate per-head partial against W_o's row block: no lane concat
                out = out + jnp.dot(hv.astype(jnp.bfloat16),
                                    w_ref[b, h * dh:(h + 1) * dh, 3 * D:4 * D],
                                    preferred_element_type=jnp.float32)
            return out

        r1 = jnp.maximum(attn_last(i1, 0), 0.0).astype(jnp.bfloat16)   # (1,D)
        r2 = jnp.maximum(attn_last(i2, 1), 0.0).astype(jnp.bfloat16)
        pk = jnp.maximum(attn_last(pm, 2), 0.0).astype(jnp.bfloat16)

        # -- output head: cat([r1,r2,pk]) @ W1 expressed as 3 row-block dots --
        head_cp.wait()                                             # head weights now in VMEM
        h1 = (jnp.dot(r1, head_w_vmem[0:D, :], preferred_element_type=jnp.float32)
              + jnp.dot(r2, head_w_vmem[D:2 * D, :], preferred_element_type=jnp.float32)
              + jnp.dot(pk, head_w_vmem[2 * D:3 * D, :], preferred_element_type=jnp.float32)
              + b_ref[1, :, 4 * D:5 * D])                          # out1 bias
        h1 = jnp.maximum(h1, 0.0).astype(jnp.bfloat16)
        out_ref[...] = (jnp.dot(h1, head_w_vmem[3 * D:4 * D, :],
                                preferred_element_type=jnp.float32)
                        + b_ref[2, :, 4 * D:5 * D])                # out2 bias (zero-padded)

    return kernel


@partial(jax.jit, static_argnames=("n_adm",))
def pkanet_forward(params, sel_pack, *, n_adm):
    """Returns padded logits (1, OUT_PAD); columns VOCAB[2].. are exactly zero."""
    vmem = pl.BlockSpec(memory_space=pltpu.MemorySpace.VMEM)
    return pl.pallas_call(
        _make_kernel(n_adm),
        out_shape=jax.ShapeDtypeStruct((1, OUT_PAD), jnp.float32),
        in_specs=[vmem,                                  # sel_pack  (3,8,128) f32
                  vmem,                                  # emb_all   (3,128,128) f32
                  vmem,                                  # w_stack   (3,128,512) bf16
                  vmem,                                  # b_stack   (3,1,640) f32
                  pl.BlockSpec(memory_space=pl.ANY)],    # head_w    (512,128) bf16, manual DMA
        out_specs=vmem,
        scratch_shapes=[pltpu.VMEM((4 * D_MODEL, OUT_PAD), jnp.bfloat16),
                        pltpu.SemaphoreType.DMA],
    )(sel_pack, params['emb_all'], params['w_stack'], params['b_stack'],
      params['head_w'])


# ---------------------------------------------------------------------------
# Parameters (deterministic synthetic init) packed into 4 contiguous buffers.
# ---------------------------------------------------------------------------
def _pe_row0(d_model):
    # Row 0 of the reference sinusoidal table: sin(0)=0 (even cols), cos(0)=1 (odd).
    row = np.zeros((1, d_model), np.float32)
    row[0, 1::2] = 1.0
    return jnp.asarray(row)


def init_params(key):
    keys = iter(jax.random.split(key, 40))

    def dense(shape, scale=0.05):
        return jax.random.normal(next(keys), shape, jnp.float32) * scale

    qk_scale = 1.0 / math.sqrt(HEAD_DIM)
    D = D_MODEL

    # Embedding tables, row-padded to EMB_ROWS and stacked -> one DMA.
    emb_all = jnp.zeros((3, EMB_ROWS, D), jnp.float32)
    for k, v in enumerate(VOCAB):
        emb_all = emb_all.at[k, :v, :].set(dense((v, D), 0.1))

    # Output head: out1 (3D -> D), out2 (D -> vocab[2], zero-padded to 128 lanes).
    out1_b = dense((1, D))
    out2_b = jnp.zeros((1, OUT_PAD), jnp.float32).at[:, :VOCAB[2]].set(dense((1, VOCAB[2])))
    out1_w = dense((3 * D, OUT_PAD))
    out2_w = jnp.zeros((D, OUT_PAD), jnp.float32).at[:, :VOCAB[2]].set(dense((D, VOCAB[2])))
    head_w = jnp.concatenate([out1_w, out2_w], axis=0).astype(jnp.bfloat16)   # (4D,128)

    # Three MHA branches packed: W = [Wq*scale | Wk | Wv | Wo]  (D,4D) bf16,
    # bias = [bq*scale | bk | bv | bo | extra]  (1,5D) f32, where `extra` carries
    # PE-row-0 / out1 bias / out2 bias for branch 0 / 1 / 2 respectively.
    extras = [_pe_row0(D), out1_b, out2_b]
    w_rows, b_rows = [], []
    for b in range(3):
        wq, wk, wv, wo = (dense((D, D)) for _ in range(4))
        bq, bk, bv, bo = (dense((1, D)) for _ in range(4))
        w_rows.append(jnp.concatenate([wq * qk_scale, wk, wv, wo], axis=1))
        b_rows.append(jnp.concatenate([bq * qk_scale, bk, bv, bo, extras[b]], axis=1))
    w_stack = jnp.stack(w_rows).astype(jnp.bfloat16)     # (3, D, 4D)
    b_stack = jnp.stack(b_rows)                          # (3, 1, 5D) f32

    return dict(emb_all=emb_all, w_stack=w_stack, b_stack=b_stack, head_w=head_w)


# ---------------------------------------------------------------------------
# Host-side input prep: ragged code lists -> dense selection tensor (pure numpy).
# ---------------------------------------------------------------------------
def prepare_inputs(input_adms):
    """sel[k, t, c] = multiplicity(code c) / len(list) so sel[k] @ emb[k] equals the
    torch embedding-lookup + mean (duplicates included).  Only the LAST admission's
    meds matter (reference: `priorMed = Med` after the loop)."""
    n_adm = len(input_adms)
    assert 1 <= n_adm <= SEL_ROWS
    sel = np.zeros((3, SEL_ROWS, EMB_ROWS), np.float32)
    for t, adm in enumerate(input_adms):
        for k, codes in ((0, adm[0]), (1, adm[1])):
            codes = list(codes) if len(codes) > 0 else [0]   # guard: ref would NaN on empty
            w = 1.0 / len(codes)
            for c in codes:
                sel[k, t, c] += w
    meds = list(input_adms[-1][3]) if len(input_adms[-1][3]) > 0 else [0]
    for c in meds:
        sel[2, 0, c] += 1.0 / len(meds)
    return jnp.asarray(sel), n_adm


if __name__ == "__main__":
    key = jax.random.PRNGKey(0)
    params = init_params(key)

    # Synthetic patient: 3 admissions; adm = [diag_codes, proc_codes, _, med_codes].
    input_adms = [
        [[3, 17, 42, 5], [7, 11, 23, 2, 9], None, [1, 4, 8]],
        [[12, 6, 33], [14, 21, 30, 44], None, [2, 9, 17, 25]],
        [[8, 29, 55, 61, 2], [5, 18], None, []],          # empty meds -> [0] fallback
    ]
    sel_pack, n_adm = prepare_inputs(input_adms)

    out_pad = pkanet_forward(params, sel_pack, n_adm=n_adm)
    out_pad = jax.block_until_ready(out_pad)

    logits = np.asarray(out_pad)[:, :VOCAB[2]]            # host-side slice of padded row
    assert out_pad.shape == (1, OUT_PAD) and out_pad.dtype == jnp.float32
    assert logits.shape == (1, VOCAB[2])
    assert np.all(np.isfinite(logits))
    assert np.allclose(np.asarray(out_pad)[:, VOCAB[2]:], 0.0)   # padded cols stay zero
    print("KERNEL_OK")
</pallas_src>

<mosaic_0001>
module attributes {stable_mosaic.version = 11 : i64} {
  func.func @kernel(%arg0: memref<3x8x128xf32, #tpu.memory_space<vmem>>, %arg1: memref<3x128x128xf32, #tpu.memory_space<vmem>>, %arg2: memref<3x128x512xbf16, #tpu.memory_space<vmem>>, %arg3: memref<3x1x640xf32, #tpu.memory_space<vmem>>, %arg4: memref<512x128xbf16, #tpu.memory_space<any>>, %arg5: memref<1x128xf32, #tpu.memory_space<vmem>>, %arg6: memref<512x128xbf16, #tpu.memory_space<vmem>>, %arg7: memref<!tpu.dma_semaphore, #tpu.memory_space<semaphore_mem>>) attributes {dimension_semantics = [], scalar_prefetch = 0 : i64, scratch_operands = 2 : i64, tpu.core_type = #tpu.core_type<tc>} {
    tpu.enqueue_dma source(%arg4 : memref<512x128xbf16, #tpu.memory_space<any>>) target(%arg6 : memref<512x128xbf16, #tpu.memory_space<vmem>>) target_semaphore(%arg7 : memref<!tpu.dma_semaphore, #tpu.memory_space<semaphore_mem>>)
    %c0 = arith.constant 0 : index
    %c0_0 = arith.constant 0 : index
    %c512 = arith.constant 512 : index
    %0 = vector.load %arg3[%c0, %c0_0, %c512] : memref<3x1x640xf32, #tpu.memory_space<vmem>>, vector<1x1x128xf32>
    %1 = vector.shape_cast %0 : vector<1x1x128xf32> to vector<1x128xf32>
    %c0_1 = arith.constant 0 : index
    %c0_2 = arith.constant 0 : index
    %c0_3 = arith.constant 0 : index
    %2 = vector.load %arg0[%c0_1, %c0_2, %c0_3] : memref<3x8x128xf32, #tpu.memory_space<vmem>>, vector<1x8x128xf32>
    %3 = vector.shape_cast %2 : vector<1x8x128xf32> to vector<8x128xf32>
    %c0_4 = arith.constant 0 : index
    %c0_5 = arith.constant 0 : index
    %c0_6 = arith.constant 0 : index
    %4 = vector.load %arg1[%c0_4, %c0_5, %c0_6] : memref<3x128x128xf32, #tpu.memory_space<vmem>>, vector<1x128x128xf32>
    %5 = vector.shape_cast %4 : vector<1x128x128xf32> to vector<128x128xf32>
    %cst = arith.constant dense<0.000000e+00> : vector<8x128xf32>
    %6 = tpu.matmul %3, %5, %cst {dimension_numbers = #tpu.dot_dimension_numbers<[1], [0], [0], [1], [0, 0, 1, 1], [], []>} : vector<8x128xf32>, vector<128x128xf32>, vector<8x128xf32> -> vector<8x128xf32>
    %c1 = arith.constant 1 : index
    %c0_7 = arith.constant 0 : index
    %c0_8 = arith.constant 0 : index
    %7 = vector.load %arg0[%c1, %c0_7, %c0_8] : memref<3x8x128xf32, #tpu.memory_space<vmem>>, vector<1x8x128xf32>
    %8 = vector.shape_cast %7 : vector<1x8x128xf32> to vector<8x128xf32>
    %c1_9 = arith.constant 1 : index
    %c0_10 = arith.constant 0 : index
    %c0_11 = arith.constant 0 : index
    %9 = vector.load %arg1[%c1_9, %c0_10, %c0_11] : memref<3x128x128xf32, #tpu.memory_space<vmem>>, vector<1x128x128xf32>
    %10 = vector.shape_cast %9 : vector<1x128x128xf32> to vector<128x128xf32>
    %cst_12 = arith.constant dense<0.000000e+00> : vector<8x128xf32>
    %11 = tpu.matmul %8, %10, %cst_12 {dimension_numbers = #tpu.dot_dimension_numbers<[1], [0], [0], [1], [0, 0, 1, 1], [], []>} : vector<8x128xf32>, vector<128x128xf32>, vector<8x128xf32> -> vector<8x128xf32>
    %c2 = arith.constant 2 : index
    %c0_13 = arith.constant 0 : index
    %c0_14 = arith.constant 0 : index
    %12 = vector.load %arg0[%c2, %c0_13, %c0_14] : memref<3x8x128xf32, #tpu.memory_space<vmem>>, vector<1x8x128xf32>
    %13 = vector.shape_cast %12 : vector<1x8x128xf32> to vector<8x128xf32>
    %c2_15 = arith.constant 2 : index
    %c0_16 = arith.constant 0 : index
    %c0_17 = arith.constant 0 : index
    %14 = vector.load %arg1[%c2_15, %c0_16, %c0_17] : memref<3x128x128xf32, #tpu.memory_space<vmem>>, vector<1x128x128xf32>
    %15 = vector.shape_cast %14 : vector<1x128x128xf32> to vector<128x128xf32>
    %cst_18 = arith.constant dense<0.000000e+00> : vector<8x128xf32>
    %16 = tpu.matmul %13, %15, %cst_18 {dimension_numbers = #tpu.dot_dimension_numbers<[1], [0], [0], [1], [0, 0, 1, 1], [], []>} : vector<8x128xf32>, vector<128x128xf32>, vector<8x128xf32> -> vector<8x128xf32>
    %17 = vector.extract_strided_slice %6 {offsets = [0, 0], sizes = [3, 128], strides = [1, 1]} : vector<8x128xf32> to vector<3x128xf32>
    %cst_19 = arith.constant 1.280000e+02 : f32
    %18 = vector.broadcast %cst_19 : f32 to vector<3x128xf32>
    %19 = arith.mulf %17, %18 : vector<3x128xf32>
    %20 = vector.broadcast %1 : vector<1x128xf32> to vector<3x128xf32>
    %21 = arith.addf %19, %20 : vector<3x128xf32>
    %22 = vector.extract_strided_slice %11 {offsets = [0, 0], sizes = [3, 128], strides = [1, 1]} : vector<8x128xf32> to vector<3x128xf32>
    %cst_20 = arith.constant 1.280000e+02 : f32
    %23 = vector.broadcast %cst_20 : f32 to vector<3x128xf32>
    %24 = arith.mulf %22, %23 : vector<3x128xf32>
    %25 = vector.broadcast %1 : vector<1x128xf32> to vector<3x128xf32>
    %26 = arith.addf %24, %25 : vector<3x128xf32>
    %27 = vector.extract_strided_slice %16 {offsets = [0, 0], sizes = [1, 128], strides = [1, 1]} : vector<8x128xf32> to vector<1x128xf32>
    %c0_21 = arith.constant 0 : index
    %c0_22 = arith.constant 0 : index
    %c0_23 = arith.constant 0 : index
    %28 = vector.load %arg3[%c0_21, %c0_22, %c0_23] : memref<3x1x640xf32, #tpu.memory_space<vmem>>, vector<1x1x640xf32>
    %29 = vector.shape_cast %28 : vector<1x1x640xf32> to vector<1x640xf32>
    %30 = arith.truncf %21 : vector<3x128xf32> to vector<3x128xbf16>
    %c0_24 = arith.constant 0 : index
    %c0_25 = arith.constant 0 : index
    %c0_26 = arith.constant 0 : index
    %31 = vector.load %arg2[%c0_24, %c0_25, %c0_26] : memref<3x128x512xbf16, #tpu.memory_space<vmem>>, vector<1x128x384xbf16>
    %32 = vector.shape_cast %31 : vector<1x128x384xbf16> to vector<128x384xbf16>
    %cst_27 = arith.constant dense<0.000000e+00> : vector<3x384xf32>
    %33 = tpu.matmul %30, %32, %cst_27 {dimension_numbers = #tpu.dot_dimension_numbers<[1], [0], [0], [1], [0, 0, 1, 1], [], []>} : vector<3x128xbf16>, vector<128x384xbf16>, vector<3x384xf32> -> vector<3x384xf32>
    %34 = vector.extract_strided_slice %29 {offsets = [0, 0], sizes = [1, 384], strides = [1, 1]} : vector<1x640xf32> to vector<1x384xf32>
    %35 = vector.broadcast %34 : vector<1x384xf32> to vector<3x384xf32>
    %36 = arith.addf %33, %35 : vector<3x384xf32>
    %37 = vector.extract_strided_slice %36 {offsets = [0, 128], sizes = [3, 128], strides = [1, 1]} : vector<3x384xf32> to vector<3x128xf32>
    %38 = tpu.transpose %37, [1, 0] : vector<3x128xf32> -> vector<128x3xf32>
    %39 = vector.extract_strided_slice %36 {offsets = [2, 0], sizes = [1, 128], strides = [1, 1]} : vector<3x384xf32> to vector<1x128xf32>
    %40 = vector.extract_strided_slice %29 {offsets = [0, 384], sizes = [1, 128], strides = [1, 1]} : vector<1x640xf32> to vector<1x128xf32>
    %41 = vector.extract_strided_slice %39 {offsets = [0, 0], sizes = [1, 32], strides = [1, 1]} : vector<1x128xf32> to vector<1x32xf32>
    %42 = vector.extract_strided_slice %38 {offsets = [0, 0], sizes = [32, 3], strides = [1, 1]} : vector<128x3xf32> to vector<32x3xf32>
    %43 = vector.extract_strided_slice %36 {offsets = [0, 256], sizes = [3, 32], strides = [1, 1]} : vector<3x384xf32> to vector<3x32xf32>
    %cst_28 = arith.constant dense<0.000000e+00> : vector<1x3xf32>
    %44 = tpu.matmul %41, %42, %cst_28 {dimension_numbers = #tpu.dot_dimension_numbers<[1], [0], [0], [1], [0, 0, 1, 1], [], []>} : vector<1x32xf32>, vector<32x3xf32>, vector<1x3xf32> -> vector<1x3xf32>
    %cst_29 = arith.constant dense<0xFF800000> : vector<1xf32>
    %45 = vector.multi_reduction <maximumf>, %44, %cst_29 [1] : vector<1x3xf32> to vector<1xf32>
    %46 = vector.shape_cast %45 : vector<1xf32> to vector<1x1xf32>
    %47 = vector.broadcast %46 : vector<1x1xf32> to vector<1x3xf32>
    %48 = arith.subf %44, %47 : vector<1x3xf32>
    %49 = math.exp %48 : vector<1x3xf32>
    %cst_30 = arith.constant dense<0.000000e+00> : vector<1xf32>
    %50 = vector.multi_reduction <add>, %49, %cst_30 [1] : vector<1x3xf32> to vector<1xf32>
    %51 = vector.shape_cast %50 : vector<1xf32> to vector<1x1xf32>
    %52 = tpu.reciprocal %51 {approx = true} : vector<1x1xf32> -> vector<1x1xf32>
    %53 = vector.broadcast %52 : vector<1x1xf32> to vector<1x3xf32>
    %54 = arith.mulf %49, %53 : vector<1x3xf32>
    %cst_31 = arith.constant dense<0.000000e+00> : vector<1x32xf32>
    %55 = tpu.matmul %54, %43, %cst_31 {dimension_numbers = #tpu.dot_dimension_numbers<[1], [0], [0], [1], [0, 0, 1, 1], [], []>} : vector<1x3xf32>, vector<3x32xf32>, vector<1x32xf32> -> vector<1x32xf32>
    %56 = arith.truncf %55 : vector<1x32xf32> to vector<1x32xbf16>
    %c0_32 = arith.constant 0 : index
    %c0_33 = arith.constant 0 : index
    %c384 = arith.constant 384 : index
    %57 = vector.load %arg2[%c0_32, %c0_33, %c384] : memref<3x128x512xbf16, #tpu.memory_space<vmem>>, vector<1x32x128xbf16>
    %58 = vector.shape_cast %57 : vector<1x32x128xbf16> to vector<32x128xbf16>
    %cst_34 = arith.constant dense<0.000000e+00> : vector<1x128xf32>
    %59 = tpu.matmul %56, %58, %cst_34 {dimension_numbers = #tpu.dot_dimension_numbers<[1], [0], [0], [1], [0, 0, 1, 1], [], []>} : vector<1x32xbf16>, vector<32x128xbf16>, vector<1x128xf32> -> vector<1x128xf32>
    %60 = arith.addf %40, %59 : vector<1x128xf32>
    %61 = vector.extract_strided_slice %39 {offsets = [0, 32], sizes = [1, 32], strides = [1, 1]} : vector<1x128xf32> to vector<1x32xf32>
    %62 = vector.extract_strided_slice %38 {offsets = [32, 0], sizes = [32, 3], strides = [1, 1]} : vector<128x3xf32> to vector<32x3xf32>
    %63 = vector.extract_strided_slice %36 {offsets = [0, 288], sizes = [3, 32], strides = [1, 1]} : vector<3x384xf32> to vector<3x32xf32>
    %cst_35 = arith.constant dense<0.000000e+00> : vector<1x3xf32>
    %64 = tpu.matmul %61, %62, %cst_35 {dimension_numbers = #tpu.dot_dimension_numbers<[1], [0], [0], [1], [0, 0, 1, 1], [], []>} : vector<1x32xf32>, vector<32x3xf32>, vector<1x3xf32> -> vector<1x3xf32>
    %cst_36 = arith.constant dense<0xFF800000> : vector<1xf32>
    %65 = vector.multi_reduction <maximumf>, %64, %cst_36 [1] : vector<1x3xf32> to vector<1xf32>
    %66 = vector.shape_cast %65 : vector<1xf32> to vector<1x1xf32>
    %67 = vector.broadcast %66 : vector<1x1xf32> to vector<1x3xf32>
    %68 = arith.subf %64, %67 : vector<1x3xf32>
    %69 = math.exp %68 : vector<1x3xf32>
    %cst_37 = arith.constant dense<0.000000e+00> : vector<1xf32>
    %70 = vector.multi_reduction <add>, %69, %cst_37 [1] : vector<1x3xf32> to vector<1xf32>
    %71 = vector.shape_cast %70 : vector<1xf32> to vector<1x1xf32>
    %72 = tpu.reciprocal %71 {approx = true} : vector<1x1xf32> -> vector<1x1xf32>
    %73 = vector.broadcast %72 : vector<1x1xf32> to vector<1x3xf32>
    %74 = arith.mulf %69, %73 : vector<1x3xf32>
    %cst_38 = arith.constant dense<0.000000e+00> : vector<1x32xf32>
    %75 = tpu.matmul %74, %63, %cst_38 {dimension_numbers = #tpu.dot_dimension_numbers<[1], [0], [0], [1], [0, 0, 1, 1], [], []>} : vector<1x3xf32>, vector<3x32xf32>, vector<1x32xf32> -> vector<1x32xf32>
    %76 = arith.truncf %75 : vector<1x32xf32> to vector<1x32xbf16>
    %c0_39 = arith.constant 0 : index
    %c32 = arith.constant 32 : index
    %c384_40 = arith.constant 384 : index
    %77 = vector.load %arg2[%c0_39, %c32, %c384_40] : memref<3x128x512xbf16, #tpu.memory_space<vmem>>, vector<1x32x128xbf16>
    %78 = vector.shape_cast %77 : vector<1x32x128xbf16> to vector<32x128xbf16>
    %cst_41 = arith.constant dense<0.000000e+00> : vector<1x128xf32>
    %79 = tpu.matmul %76, %78, %cst_41 {dimension_numbers = #tpu.dot_dimension_numbers<[1], [0], [0], [1], [0, 0, 1, 1], [], []>} : vector<1x32xbf16>, vector<32x128xbf16>, vector<1x128xf32> -> vector<1x128xf32>
    %80 = arith.addf %60, %79 : vector<1x128xf32>
    %81 = vector.extract_strided_slice %39 {offsets = [0, 64], sizes = [1, 32], strides = [1, 1]} : vector<1x128xf32> to vector<1x32xf32>
    %82 = vector.extract_strided_slice %38 {offsets = [64, 0], sizes = [32, 3], strides = [1, 1]} : vector<128x3xf32> to vector<32x3xf32>
    %83 = vector.extract_strided_slice %36 {offsets = [0, 320], sizes = [3, 32], strides = [1, 1]} : vector<3x384xf32> to vector<3x32xf32>
    %cst_42 = arith.constant dense<0.000000e+00> : vector<1x3xf32>
    %84 = tpu.matmul %81, %82, %cst_42 {dimension_numbers = #tpu.dot_dimension_numbers<[1], [0], [0], [1], [0, 0, 1, 1], [], []>} : vector<1x32xf32>, vector<32x3xf32>, vector<1x3xf32> -> vector<1x3xf32>
    %cst_43 = arith.constant dense<0xFF800000> : vector<1xf32>
    %85 = vector.multi_reduction <maximumf>, %84, %cst_43 [1] : vector<1x3xf32> to vector<1xf32>
    %86 = vector.shape_cast %85 : vector<1xf32> to vector<1x1xf32>
    %87 = vector.broadcast %86 : vector<1x1xf32> to vector<1x3xf32>
    %88 = arith.subf %84, %87 : vector<1x3xf32>
    %89 = math.exp %88 : vector<1x3xf32>
    %cst_44 = arith.constant dense<0.000000e+00> : vector<1xf32>
    %90 = vector.multi_reduction <add>, %89, %cst_44 [1] : vector<1x3xf32> to vector<1xf32>
    %91 = vector.shape_cast %90 : vector<1xf32> to vector<1x1xf32>
    %92 = tpu.reciprocal %91 {approx = true} : vector<1x1xf32> -> vector<1x1xf32>
    %93 = vector.broadcast %92 : vector<1x1xf32> to vector<1x3xf32>
    %94 = arith.mulf %89, %93 : vector<1x3xf32>
    %cst_45 = arith.constant dense<0.000000e+00> : vector<1x32xf32>
    %95 = tpu.matmul %94, %83, %cst_45 {dimension_numbers = #tpu.dot_dimension_numbers<[1], [0], [0], [1], [0, 0, 1, 1], [], []>} : vector<1x3xf32>, vector<3x32xf32>, vector<1x32xf32> -> vector<1x32xf32>
    %96 = arith.truncf %95 : vector<1x32xf32> to vector<1x32xbf16>
    %c0_46 = arith.constant 0 : index
    %c64 = arith.constant 64 : index
    %c384_47 = arith.constant 384 : index
    %97 = vector.load %arg2[%c0_46, %c64, %c384_47] : memref<3x128x512xbf16, #tpu.memory_space<vmem>>, vector<1x32x128xbf16>
    %98 = vector.shape_cast %97 : vector<1x32x128xbf16> to vector<32x128xbf16>
    %cst_48 = arith.constant dense<0.000000e+00> : vector<1x128xf32>
    %99 = tpu.matmul %96, %98, %cst_48 {dimension_numbers = #tpu.dot_dimension_numbers<[1], [0], [0], [1], [0, 0, 1, 1], [], []>} : vector<1x32xbf16>, vector<32x128xbf16>, vector<1x128xf32> -> vector<1x128xf32>
    %100 = arith.addf %80, %99 : vector<1x128xf32>
    %101 = vector.extract_strided_slice %39 {offsets = [0, 96], sizes = [1, 32], strides = [1, 1]} : vector<1x128xf32> to vector<1x32xf32>
    %102 = vector.extract_strided_slice %38 {offsets = [96, 0], sizes = [32, 3], strides = [1, 1]} : vector<128x3xf32> to vector<32x3xf32>
    %103 = vector.extract_strided_slice %36 {offsets = [0, 352], sizes = [3, 32], strides = [1, 1]} : vector<3x384xf32> to vector<3x32xf32>
    %cst_49 = arith.constant dense<0.000000e+00> : vector<1x3xf32>
    %104 = tpu.matmul %101, %102, %cst_49 {dimension_numbers = #tpu.dot_dimension_numbers<[1], [0], [0], [1], [0, 0, 1, 1], [], []>} : vector<1x32xf32>, vector<32x3xf32>, vector<1x3xf32> -> vector<1x3xf32>
    %cst_50 = arith.constant dense<0xFF800000> : vector<1xf32>
    %105 = vector.multi_reduction <maximumf>, %104, %cst_50 [1] : vector<1x3xf32> to vector<1xf32>
    %106 = vector.shape_cast %105 : vector<1xf32> to vector<1x1xf32>
    %107 = vector.broadcast %106 : vector<1x1xf32> to vector<1x3xf32>
    %108 = arith.subf %104, %107 : vector<1x3xf32>
    %109 = math.exp %108 : vector<1x3xf32>
    %cst_51 = arith.constant dense<0.000000e+00> : vector<1xf32>
    %110 = vector.multi_reduction <add>, %109, %cst_51 [1] : vector<1x3xf32> to vector<1xf32>
    %111 = vector.shape_cast %110 : vector<1xf32> to vector<1x1xf32>
    %112 = tpu.reciprocal %111 {approx = true} : vector<1x1xf32> -> vector<1x1xf32>
    %113 = vector.broadcast %112 : vector<1x1xf32> to vector<1x3xf32>
    %114 = arith.mulf %109, %113 : vector<1x3xf32>
    %cst_52 = arith.constant dense<0.000000e+00> : vector<1x32xf32>
    %115 = tpu.matmul %114, %103, %cst_52 {dimension_numbers = #tpu.dot_dimension_numbers<[1], [0], [0], [1], [0, 0, 1, 1], [], []>} : vector<1x3xf32>, vector<3x32xf32>, vector<1x32xf32> -> vector<1x32xf32>
    %116 = arith.truncf %115 : vector<1x32xf32> to vector<1x32xbf16>
    %c0_53 = arith.constant 0 : index
    %c96 = arith.constant 96 : index
    %c384_54 = arith.constant 384 : index
    %117 = vector.load %arg2[%c0_53, %c96, %c384_54] : memref<3x128x512xbf16, #tpu.memory_space<vmem>>, vector<1x32x128xbf16>
    %118 = vector.shape_cast %117 : vector<1x32x128xbf16> to vector<32x128xbf16>
    %cst_55 = arith.constant dense<0.000000e+00> : vector<1x128xf32>
    %119 = tpu.matmul %116, %118, %cst_55 {dimension_numbers = #tpu.dot_dimension_numbers<[1], [0], [0], [1], [0, 0, 1, 1], [], []>} : vector<1x32xbf16>, vector<32x128xbf16>, vector<1x128xf32> -> vector<1x128xf32>
    %120 = arith.addf %100, %119 : vector<1x128xf32>
    %cst_56 = arith.constant 0.000000e+00 : f32
    %121 = vector.broadcast %cst_56 : f32 to vector<1x128xf32>
    %122 = arith.maximumf %120, %121 : vector<1x128xf32>
    %123 = arith.truncf %122 : vector<1x128xf32> to vector<1x128xbf16>
    %c1_57 = arith.constant 1 : index
    %c0_58 = arith.constant 0 : index
    %c0_59 = arith.constant 0 : index
    %124 = vector.load %arg3[%c1_57, %c0_58, %c0_59] : memref<3x1x640xf32, #tpu.memory_space<vmem>>, vector<1x1x640xf32>
    %125 = vector.shape_cast %124 : vector<1x1x640xf32> to vector<1x640xf32>
    %126 = arith.truncf %26 : vector<3x128xf32> to vector<3x128xbf16>
    %c1_60 = arith.constant 1 : index
    %c0_61 = arith.constant 0 : index
    %c0_62 = arith.constant 0 : index
    %127 = vector.load %arg2[%c1_60, %c0_61, %c0_62] : memref<3x128x512xbf16, #tpu.memory_space<vmem>>, vector<1x128x384xbf16>
    %128 = vector.shape_cast %127 : vector<1x128x384xbf16> to vector<128x384xbf16>
    %cst_63 = arith.constant dense<0.000000e+00> : vector<3x384xf32>
    %129 = tpu.matmul %126, %128, %cst_63 {dimension_numbers = #tpu.dot_dimension_numbers<[1], [0], [0], [1], [0, 0, 1, 1], [], []>} : vector<3x128xbf16>, vector<128x384xbf16>, vector<3x384xf32> -> vector<3x384xf32>
    %130 = vector.extract_strided_slice %125 {offsets = [0, 0], sizes = [1, 384], strides = [1, 1]} : vector<1x640xf32> to vector<1x384xf32>
    %131 = vector.broadcast %130 : vector<1x384xf32> to vector<3x384xf32>
    %132 = arith.addf %129, %131 : vector<3x384xf32>
    %133 = vector.extract_strided_slice %132 {offsets = [0, 128], sizes = [3, 128], strides = [1, 1]} : vector<3x384xf32> to vector<3x128xf32>
    %134 = tpu.transpose %133, [1, 0] : vector<3x128xf32> -> vector<128x3xf32>
    %135 = vector.extract_strided_slice %132 {offsets = [2, 0], sizes = [1, 128], strides = [1, 1]} : vector<3x384xf32> to vector<1x128xf32>
    %136 = vector.extract_strided_slice %125 {offsets = [0, 384], sizes = [1, 128], strides = [1, 1]} : vector<1x640xf32> to vector<1x128xf32>
    %137 = vector.extract_strided_slice %135 {offsets = [0, 0], sizes = [1, 32], strides = [1, 1]} : vector<1x128xf32> to vector<1x32xf32>
    %138 = vector.extract_strided_slice %134 {offsets = [0, 0], sizes = [32, 3], strides = [1, 1]} : vector<128x3xf32> to vector<32x3xf32>
    %139 = vector.extract_strided_slice %132 {offsets = [0, 256], sizes = [3, 32], strides = [1, 1]} : vector<3x384xf32> to vector<3x32xf32>
    %cst_64 = arith.constant dense<0.000000e+00> : vector<1x3xf32>
    %140 = tpu.matmul %137, %138, %cst_64 {dimension_numbers = #tpu.dot_dimension_numbers<[1], [0], [0], [1], [0, 0, 1, 1], [], []>} : vector<1x32xf32>, vector<32x3xf32>, vector<1x3xf32> -> vector<1x3xf32>
    %cst_65 = arith.constant dense<0xFF800000> : vector<1xf32>
    %141 = vector.multi_reduction <maximumf>, %140, %cst_65 [1] : vector<1x3xf32> to vector<1xf32>
    %142 = vector.shape_cast %141 : vector<1xf32> to vector<1x1xf32>
    %143 = vector.broadcast %142 : vector<1x1xf32> to vector<1x3xf32>
    %144 = arith.subf %140, %143 : vector<1x3xf32>
    %145 = math.exp %144 : vector<1x3xf32>
    %cst_66 = arith.constant dense<0.000000e+00> : vector<1xf32>
    %146 = vector.multi_reduction <add>, %145, %cst_66 [1] : vector<1x3xf32> to vector<1xf32>
    %147 = vector.shape_cast %146 : vector<1xf32> to vector<1x1xf32>
    %148 = tpu.reciprocal %147 {approx = true} : vector<1x1xf32> -> vector<1x1xf32>
    %149 = vector.broadcast %148 : vector<1x1xf32> to vector<1x3xf32>
    %150 = arith.mulf %145, %149 : vector<1x3xf32>
    %cst_67 = arith.constant dense<0.000000e+00> : vector<1x32xf32>
    %151 = tpu.matmul %150, %139, %cst_67 {dimension_numbers = #tpu.dot_dimension_numbers<[1], [0], [0], [1], [0, 0, 1, 1], [], []>} : vector<1x3xf32>, vector<3x32xf32>, vector<1x32xf32> -> vector<1x32xf32>
    %152 = arith.truncf %151 : vector<1x32xf32> to vector<1x32xbf16>
    %c1_68 = arith.constant 1 : index
    %c0_69 = arith.constant 0 : index
    %c384_70 = arith.constant 384 : index
    %153 = vector.load %arg2[%c1_68, %c0_69, %c384_70] : memref<3x128x512xbf16, #tpu.memory_space<vmem>>, vector<1x32x128xbf16>
    %154 = vector.shape_cast %153 : vector<1x32x128xbf16> to vector<32x128xbf16>
    %cst_71 = arith.constant dense<0.000000e+00> : vector<1x128xf32>
    %155 = tpu.matmul %152, %154, %cst_71 {dimension_numbers = #tpu.dot_dimension_numbers<[1], [0], [0], [1], [0, 0, 1, 1], [], []>} : vector<1x32xbf16>, vector<32x128xbf16>, vector<1x128xf32> -> vector<1x128xf32>
    %156 = arith.addf %136, %155 : vector<1x128xf32>
    %157 = vector.extract_strided_slice %135 {offsets = [0, 32], sizes = [1, 32], strides = [1, 1]} : vector<1x128xf32> to vector<1x32xf32>
    %158 = vector.extract_strided_slice %134 {offsets = [32, 0], sizes = [32, 3], strides = [1, 1]} : vector<128x3xf32> to vector<32x3xf32>
    %159 = vector.extract_strided_slice %132 {offsets = [0, 288], sizes = [3, 32], strides = [1, 1]} : vector<3x384xf32> to vector<3x32xf32>
    %cst_72 = arith.constant dense<0.000000e+00> : vector<1x3xf32>
    %160 = tpu.matmul %157, %158, %cst_72 {dimension_numbers = #tpu.dot_dimension_numbers<[1], [0], [0], [1], [0, 0, 1, 1], [], []>} : vector<1x32xf32>, vector<32x3xf32>, vector<1x3xf32> -> vector<1x3xf32>
    %cst_73 = arith.constant dense<0xFF800000> : vector<1xf32>
    %161 = vector.multi_reduction <maximumf>, %160, %cst_73 [1] : vector<1x3xf32> to vector<1xf32>
    %162 = vector.shape_cast %161 : vector<1xf32> to vector<1x1xf32>
    %163 = vector.broadcast %162 : vector<1x1xf32> to vector<1x3xf32>
    %164 = arith.subf %160, %163 : vector<1x3xf32>
    %165 = math.exp %164 : vector<1x3xf32>
    %cst_74 = arith.constant dense<0.000000e+00> : vector<1xf32>
    %166 = vector.multi_reduction <add>, %165, %cst_74 [1] : vector<1x3xf32> to vector<1xf32>
    %167 = vector.shape_cast %166 : vector<1xf32> to vector<1x1xf32>
    %168 = tpu.reciprocal %167 {approx = true} : vector<1x1xf32> -> vector<1x1xf32>
    %169 = vector.broadcast %168 : vector<1x1xf32> to vector<1x3xf32>
    %170 = arith.mulf %165, %169 : vector<1x3xf32>
    %cst_75 = arith.constant dense<0.000000e+00> : vector<1x32xf32>
    %171 = tpu.matmul %170, %159, %cst_75 {dimension_numbers = #tpu.dot_dimension_numbers<[1], [0], [0], [1], [0, 0, 1, 1], [], []>} : vector<1x3xf32>, vector<3x32xf32>, vector<1x32xf32> -> vector<1x32xf32>
    %172 = arith.truncf %171 : vector<1x32xf32> to vector<1x32xbf16>
    %c1_76 = arith.constant 1 : index
    %c32_77 = arith.constant 32 : index
    %c384_78 = arith.constant 384 : index
    %173 = vector.load %arg2[%c1_76, %c32_77, %c384_78] : memref<3x128x512xbf16, #tpu.memory_space<vmem>>, vector<1x32x128xbf16>
    %174 = vector.shape_cast %173 : vector<1x32x128xbf16> to vector<32x128xbf16>
    %cst_79 = arith.constant dense<0.000000e+00> : vector<1x128xf32>
    %175 = tpu.matmul %172, %174, %cst_79 {dimension_numbers = #tpu.dot_dimension_numbers<[1], [0], [0], [1], [0, 0, 1, 1], [], []>} : vector<1x32xbf16>, vector<32x128xbf16>, vector<1x128xf32> -> vector<1x128xf32>
    %176 = arith.addf %156, %175 : vector<1x128xf32>
    %177 = vector.extract_strided_slice %135 {offsets = [0, 64], sizes = [1, 32], strides = [1, 1]} : vector<1x128xf32> to vector<1x32xf32>
    %178 = vector.extract_strided_slice %134 {offsets = [64, 0], sizes = [32, 3], strides = [1, 1]} : vector<128x3xf32> to vector<32x3xf32>
    %179 = vector.extract_strided_slice %132 {offsets = [0, 320], sizes = [3, 32], strides = [1, 1]} : vector<3x384xf32> to vector<3x32xf32>
    %cst_80 = arith.constant dense<0.000000e+00> : vector<1x3xf32>
    %180 = tpu.matmul %177, %178, %cst_80 {dimension_numbers = #tpu.dot_dimension_numbers<[1], [0], [0], [1], [0, 0, 1, 1], [], []>} : vector<1x32xf32>, vector<32x3xf32>, vector<1x3xf32> -> vector<1x3xf32>
    %cst_81 = arith.constant dense<0xFF800000> : vector<1xf32>
    %181 = vector.multi_reduction <maximumf>, %180, %cst_81 [1] : vector<1x3xf32> to vector<1xf32>
    %182 = vector.shape_cast %181 : vector<1xf32> to vector<1x1xf32>
    %183 = vector.broadcast %182 : vector<1x1xf32> to vector<1x3xf32>
    %184 = arith.subf %180, %183 : vector<1x3xf32>
    %185 = math.exp %184 : vector<1x3xf32>
    %cst_82 = arith.constant dense<0.000000e+00> : vector<1xf32>
    %186 = vector.multi_reduction <add>, %185, %cst_82 [1] : vector<1x3xf32> to vector<1xf32>
    %187 = vector.shape_cast %186 : vector<1xf32> to vector<1x1xf32>
    %188 = tpu.reciprocal %187 {approx = true} : vector<1x1xf32> -> vector<1x1xf32>
    %189 = vector.broadcast %188 : vector<1x1xf32> to vector<1x3xf32>
    %190 = arith.mulf %185, %189 : vector<1x3xf32>
    %cst_83 = arith.constant dense<0.000000e+00> : vector<1x32xf32>
    %191 = tpu.matmul %190, %179, %cst_83 {dimension_numbers = #tpu.dot_dimension_numbers<[1], [0], [0], [1], [0, 0, 1, 1], [], []>} : vector<1x3xf32>, vector<3x32xf32>, vector<1x32xf32> -> vector<1x32xf32>
    %192 = arith.truncf %191 : vector<1x32xf32> to vector<1x32xbf16>
    %c1_84 = arith.constant 1 : index
    %c64_85 = arith.constant 64 : index
    %c384_86 = arith.constant 384 : index
    %193 = vector.load %arg2[%c1_84, %c64_85, %c384_86] : memref<3x128x512xbf16, #tpu.memory_space<vmem>>, vector<1x32x128xbf16>
    %194 = vector.shape_cast %193 : vector<1x32x128xbf16> to vector<32x128xbf16>
    %cst_87 = arith.constant dense<0.000000e+00> : vector<1x128xf32>
    %195 = tpu.matmul %192, %194, %cst_87 {dimension_numbers = #tpu.dot_dimension_numbers<[1], [0], [0], [1], [0, 0, 1, 1], [], []>} : vector<1x32xbf16>, vector<32x128xbf16>, vector<1x128xf32> -> vector<1x128xf32>
    %196 = arith.addf %176, %195 : vector<1x128xf32>
    %197 = vector.extract_strided_slice %135 {offsets = [0, 96], sizes = [1, 32], strides = [1, 1]} : vector<1x128xf32> to vector<1x32xf32>
    %198 = vector.extract_strided_slice %134 {offsets = [96, 0], sizes = [32, 3], strides = [1, 1]} : vector<128x3xf32> to vector<32x3xf32>
    %199 = vector.extract_strided_slice %132 {offsets = [0, 352], sizes = [3, 32], strides = [1, 1]} : vector<3x384xf32> to vector<3x32xf32>
    %cst_88 = arith.constant dense<0.000000e+00> : vector<1x3xf32>
    %200 = tpu.matmul %197, %198, %cst_88 {dimension_numbers = #tpu.dot_dimension_numbers<[1], [0], [0], [1], [0, 0, 1, 1], [], []>} : vector<1x32xf32>, vector<32x3xf32>, vector<1x3xf32> -> vector<1x3xf32>
    %cst_89 = arith.constant dense<0xFF800000> : vector<1xf32>
    %201 = vector.multi_reduction <maximumf>, %200, %cst_89 [1] : vector<1x3xf32> to vector<1xf32>
    %202 = vector.shape_cast %201 : vector<1xf32> to vector<1x1xf32>
    %203 = vector.broadcast %202 : vector<1x1xf32> to vector<1x3xf32>
    %204 = arith.subf %200, %203 : vector<1x3xf32>
    %205 = math.exp %204 : vector<1x3xf32>
    %cst_90 = arith.constant dense<0.000000e+00> : vector<1xf32>
    %206 = vector.multi_reduction <add>, %205, %cst_90 [1] : vector<1x3xf32> to vector<1xf32>
    %207 = vector.shape_cast %206 : vector<1xf32> to vector<1x1xf32>
    %208 = tpu.reciprocal %207 {approx = true} : vector<1x1xf32> -> vector<1x1xf32>
    %209 = vector.broadcast %208 : vector<1x1xf32> to vector<1x3xf32>
    %210 = arith.mulf %205, %209 : vector<1x3xf32>
    %cst_91 = arith.constant dense<0.000000e+00> : vector<1x32xf32>
    %211 = tpu.matmul %210, %199, %cst_91 {dimension_numbers = #tpu.dot_dimension_numbers<[1], [0], [0], [1], [0, 0, 1, 1], [], []>} : vector<1x3xf32>, vector<3x32xf32>, vector<1x32xf32> -> vector<1x32xf32>
    %212 = arith.truncf %211 : vector<1x32xf32> to vector<1x32xbf16>
    %c1_92 = arith.constant 1 : index
    %c96_93 = arith.constant 96 : index
    %c384_94 = arith.constant 384 : index
    %213 = vector.load %arg2[%c1_92, %c96_93, %c384_94] : memref<3x128x512xbf16, #tpu.memory_space<vmem>>, vector<1x32x128xbf16>
    %214 = vector.shape_cast %213 : vector<1x32x128xbf16> to vector<32x128xbf16>
    %cst_95 = arith.constant dense<0.000000e+00> : vector<1x128xf32>
    %215 = tpu.matmul %212, %214, %cst_95 {dimension_numbers = #tpu.dot_dimension_numbers<[1], [0], [0], [1], [0, 0, 1, 1], [], []>} : vector<1x32xbf16>, vector<32x128xbf16>, vector<1x128xf32> -> vector<1x128xf32>
    %216 = arith.addf %196, %215 : vector<1x128xf32>
    %cst_96 = arith.constant 0.000000e+00 : f32
    %217 = vector.broadcast %cst_96 : f32 to vector<1x128xf32>
    %218 = arith.maximumf %216, %217 : vector<1x128xf32>
    %219 = arith.truncf %218 : vector<1x128xf32> to vector<1x128xbf16>
    %c2_97 = arith.constant 2 : index
    %c0_98 = arith.constant 0 : index
    %c0_99 = arith.constant 0 : index
    %220 = vector.load %arg3[%c2_97, %c0_98, %c0_99] : memref<3x1x640xf32, #tpu.memory_space<vmem>>, vector<1x1x640xf32>
    %221 = vector.shape_cast %220 : vector<1x1x640xf32> to vector<1x640xf32>
    %222 = arith.truncf %27 : vector<1x128xf32> to vector<1x128xbf16>
    %c2_100 = arith.constant 2 : index
    %c0_101 = arith.constant 0 : index
    %c0_102 = arith.constant 0 : index
    %223 = vector.load %arg2[%c2_100, %c0_101, %c0_102] : memref<3x128x512xbf16, #tpu.memory_space<vmem>>, vector<1x128x384xbf16>
    %224 = vector.shape_cast %223 : vector<1x128x384xbf16> to vector<128x384xbf16>
    %cst_103 = arith.constant dense<0.000000e+00> : vector<1x384xf32>
    %225 = tpu.matmul %222, %224, %cst_103 {dimension_numbers = #tpu.dot_dimension_numbers<[1], [0], [0], [1], [0, 0, 1, 1], [], []>} : vector<1x128xbf16>, vector<128x384xbf16>, vector<1x384xf32> -> vector<1x384xf32>
    %226 = vector.extract_strided_slice %221 {offsets = [0, 0], sizes = [1, 384], strides = [1, 1]} : vector<1x640xf32> to vector<1x384xf32>
    %227 = arith.addf %225, %226 : vector<1x384xf32>
    %228 = vector.extract_strided_slice %227 {offsets = [0, 128], sizes = [1, 128], strides = [1, 1]} : vector<1x384xf32> to vector<1x128xf32>
    %229 = tpu.transpose %228, [1, 0] : vector<1x128xf32> -> vector<128x1xf32>
    %230 = vector.extract_strided_slice %227 {offsets = [0, 0], sizes = [1, 128], strides = [1, 1]} : vector<1x384xf32> to vector<1x128xf32>
    %231 = vector.extract_strided_slice %221 {offsets = [0, 384], sizes = [1, 128], strides = [1, 1]} : vector<1x640xf32> to vector<1x128xf32>
    %232 = vector.extract_strided_slice %230 {offsets = [0, 0], sizes = [1, 32], strides = [1, 1]} : vector<1x128xf32> to vector<1x32xf32>
    %233 = vector.extract_strided_slice %229 {offsets = [0, 0], sizes = [32, 1], strides = [1, 1]} : vector<128x1xf32> to vector<32x1xf32>
    %234 = vector.extract_strided_slice %227 {offsets = [0, 256], sizes = [1, 32], strides = [1, 1]} : vector<1x384xf32> to vector<1x32xf32>
    %cst_104 = arith.constant dense<0.000000e+00> : vector<1x1xf32>
    %235 = tpu.matmul %232, %233, %cst_104 {dimension_numbers = #tpu.dot_dimension_numbers<[1], [0], [0], [1], [0, 0, 1, 1], [], []>} : vector<1x32xf32>, vector<32x1xf32>, vector<1x1xf32> -> vector<1x1xf32>
    %cst_105 = arith.constant dense<0xFF800000> : vector<1xf32>
    %236 = vector.multi_reduction <maximumf>, %235, %cst_105 [1] : vector<1x1xf32> to vector<1xf32>
    %237 = vector.shape_cast %236 : vector<1xf32> to vector<1x1xf32>
    %238 = arith.subf %235, %237 : vector<1x1xf32>
    %239 = math.exp %238 : vector<1x1xf32>
    %cst_106 = arith.constant dense<0.000000e+00> : vector<1xf32>
    %240 = vector.multi_reduction <add>, %239, %cst_106 [1] : vector<1x1xf32> to vector<1xf32>
    %241 = vector.shape_cast %240 : vector<1xf32> to vector<1x1xf32>
    %242 = tpu.reciprocal %241 {approx = true} : vector<1x1xf32> -> vector<1x1xf32>
    %243 = arith.mulf %239, %242 : vector<1x1xf32>
    %cst_107 = arith.constant dense<0.000000e+00> : vector<1x32xf32>
    %244 = tpu.matmul %243, %234, %cst_107 {dimension_numbers = #tpu.dot_dimension_numbers<[1], [0], [0], [1], [0, 0, 1, 1], [], []>} : vector<1x1xf32>, vector<1x32xf32>, vector<1x32xf32> -> vector<1x32xf32>
    %245 = arith.truncf %244 : vector<1x32xf32> to vector<1x32xbf16>
    %c2_108 = arith.constant 2 : index
    %c0_109 = arith.constant 0 : index
    %c384_110 = arith.constant 384 : index
    %246 = vector.load %arg2[%c2_108, %c0_109, %c384_110] : memref<3x128x512xbf16, #tpu.memory_space<vmem>>, vector<1x32x128xbf16>
    %247 = vector.shape_cast %246 : vector<1x32x128xbf16> to vector<32x128xbf16>
    %cst_111 = arith.constant dense<0.000000e+00> : vector<1x128xf32>
    %248 = tpu.matmul %245, %247, %cst_111 {dimension_numbers = #tpu.dot_dimension_numbers<[1], [0], [0], [1], [0, 0, 1, 1], [], []>} : vector<1x32xbf16>, vector<32x128xbf16>, vector<1x128xf32> -> vector<1x128xf32>
    %249 = arith.addf %231, %248 : vector<1x128xf32>
    %250 = vector.extract_strided_slice %230 {offsets = [0, 32], sizes = [1, 32], strides = [1, 1]} : vector<1x128xf32> to vector<1x32xf32>
    %251 = vector.extract_strided_slice %229 {offsets = [32, 0], sizes = [32, 1], strides = [1, 1]} : vector<128x1xf32> to vector<32x1xf32>
    %252 = vector.extract_strided_slice %227 {offsets = [0, 288], sizes = [1, 32], strides = [1, 1]} : vector<1x384xf32> to vector<1x32xf32>
    %cst_112 = arith.constant dense<0.000000e+00> : vector<1x1xf32>
    %253 = tpu.matmul %250, %251, %cst_112 {dimension_numbers = #tpu.dot_dimension_numbers<[1], [0], [0], [1], [0, 0, 1, 1], [], []>} : vector<1x32xf32>, vector<32x1xf32>, vector<1x1xf32> -> vector<1x1xf32>
    %cst_113 = arith.constant dense<0xFF800000> : vector<1xf32>
    %254 = vector.multi_reduction <maximumf>, %253, %cst_113 [1] : vector<1x1xf32> to vector<1xf32>
    %255 = vector.shape_cast %254 : vector<1xf32> to vector<1x1xf32>
    %256 = arith.subf %253, %255 : vector<1x1xf32>
    %257 = math.exp %256 : vector<1x1xf32>
    %cst_114 = arith.constant dense<0.000000e+00> : vector<1xf32>
    %258 = vector.multi_reduction <add>, %257, %cst_114 [1] : vector<1x1xf32> to vector<1xf32>
    %259 = vector.shape_cast %258 : vector<1xf32> to vector<1x1xf32>
    %260 = tpu.reciprocal %259 {approx = true} : vector<1x1xf32> -> vector<1x1xf32>
    %261 = arith.mulf %257, %260 : vector<1x1xf32>
    %cst_115 = arith.constant dense<0.000000e+00> : vector<1x32xf32>
    %262 = tpu.matmul %261, %252, %cst_115 {dimension_numbers = #tpu.dot_dimension_numbers<[1], [0], [0], [1], [0, 0, 1, 1], [], []>} : vector<1x1xf32>, vector<1x32xf32>, vector<1x32xf32> -> vector<1x32xf32>
    %263 = arith.truncf %262 : vector<1x32xf32> to vector<1x32xbf16>
    %c2_116 = arith.constant 2 : index
    %c32_117 = arith.constant 32 : index
    %c384_118 = arith.constant 384 : index
    %264 = vector.load %arg2[%c2_116, %c32_117, %c384_118] : memref<3x128x512xbf16, #tpu.memory_space<vmem>>, vector<1x32x128xbf16>
    %265 = vector.shape_cast %264 : vector<1x32x128xbf16> to vector<32x128xbf16>
    %cst_119 = arith.constant dense<0.000000e+00> : vector<1x128xf32>
    %266 = tpu.matmul %263, %265, %cst_119 {dimension_numbers = #tpu.dot_dimension_numbers<[1], [0], [0], [1], [0, 0, 1, 1], [], []>} : vector<1x32xbf16>, vector<32x128xbf16>, vector<1x128xf32> -> vector<1x128xf32>
    %267 = arith.addf %249, %266 : vector<1x128xf32>
    %268 = vector.extract_strided_slice %230 {offsets = [0, 64], sizes = [1, 32], strides = [1, 1]} : vector<1x128xf32> to vector<1x32xf32>
    %269 = vector.extract_strided_slice %229 {offsets = [64, 0], sizes = [32, 1], strides = [1, 1]} : vector<128x1xf32> to vector<32x1xf32>
    %270 = vector.extract_strided_slice %227 {offsets = [0, 320], sizes = [1, 32], strides = [1, 1]} : vector<1x384xf32> to vector<1x32xf32>
    %cst_120 = arith.constant dense<0.000000e+00> : vector<1x1xf32>
    %271 = tpu.matmul %268, %269, %cst_120 {dimension_numbers = #tpu.dot_dimension_numbers<[1], [0], [0], [1], [0, 0, 1, 1], [], []>} : vector<1x32xf32>, vector<32x1xf32>, vector<1x1xf32> -> vector<1x1xf32>
    %cst_121 = arith.constant dense<0xFF800000> : vector<1xf32>
    %272 = vector.multi_reduction <maximumf>, %271, %cst_121 [1] : vector<1x1xf32> to vector<1xf32>
    %273 = vector.shape_cast %272 : vector<1xf32> to vector<1x1xf32>
    %274 = arith.subf %271, %273 : vector<1x1xf32>
    %275 = math.exp %274 : vector<1x1xf32>
    %cst_122 = arith.constant dense<0.000000e+00> : vector<1xf32>
    %276 = vector.multi_reduction <add>, %275, %cst_122 [1] : vector<1x1xf32> to vector<1xf32>
    %277 = vector.shape_cast %276 : vector<1xf32> to vector<1x1xf32>
    %278 = tpu.reciprocal %277 {approx = true} : vector<1x1xf32> -> vector<1x1xf32>
    %279 = arith.mulf %275, %278 : vector<1x1xf32>
    %cst_123 = arith.constant dense<0.000000e+00> : vector<1x32xf32>
    %280 = tpu.matmul %279, %270, %cst_123 {dimension_numbers = #tpu.dot_dimension_numbers<[1], [0], [0], [1], [0, 0, 1, 1], [], []>} : vector<1x1xf32>, vector<1x32xf32>, vector<1x32xf32> -> vector<1x32xf32>
    %281 = arith.truncf %280 : vector<1x32xf32> to vector<1x32xbf16>
    %c2_124 = arith.constant 2 : index
    %c64_125 = arith.constant 64 : index
    %c384_126 = arith.constant 384 : index
    %282 = vector.load %arg2[%c2_124, %c64_125, %c384_126] : memref<3x128x512xbf16, #tpu.memory_space<vmem>>, vector<1x32x128xbf16>
    %283 = vector.shape_cast %282 : vector<1x32x128xbf16> to vector<32x128xbf16>
    %cst_127 = arith.constant dense<0.000000e+00> : vector<1x128xf32>
    %284 = tpu.matmul %281, %283, %cst_127 {dimension_numbers = #tpu.dot_dimension_numbers<[1], [0], [0], [1], [0, 0, 1, 1], [], []>} : vector<1x32xbf16>, vector<32x128xbf16>, vector<1x128xf32> -> vector<1x128xf32>
    %285 = arith.addf %267, %284 : vector<1x128xf32>
    %286 = vector.extract_strided_slice %230 {offsets = [0, 96], sizes = [1, 32], strides = [1, 1]} : vector<1x128xf32> to vector<1x32xf32>
    %287 = vector.extract_strided_slice %229 {offsets = [96, 0], sizes = [32, 1], strides = [1, 1]} : vector<128x1xf32> to vector<32x1xf32>
    %288 = vector.extract_strided_slice %227 {offsets = [0, 352], sizes = [1, 32], strides = [1, 1]} : vector<1x384xf32> to vector<1x32xf32>
    %cst_128 = arith.constant dense<0.000000e+00> : vector<1x1xf32>
    %289 = tpu.matmul %286, %287, %cst_128 {dimension_numbers = #tpu.dot_dimension_numbers<[1], [0], [0], [1], [0, 0, 1, 1], [], []>} : vector<1x32xf32>, vector<32x1xf32>, vector<1x1xf32> -> vector<1x1xf32>
    %cst_129 = arith.constant dense<0xFF800000> : vector<1xf32>
    %290 = vector.multi_reduction <maximumf>, %289, %cst_129 [1] : vector<1x1xf32> to vector<1xf32>
    %291 = vector.shape_cast %290 : vector<1xf32> to vector<1x1xf32>
    %292 = arith.subf %289, %291 : vector<1x1xf32>
    %293 = math.exp %292 : vector<1x1xf32>
    %cst_130 = arith.constant dense<0.000000e+00> : vector<1xf32>
    %294 = vector.multi_reduction <add>, %293, %cst_130 [1] : vector<1x1xf32> to vector<1xf32>
    %295 = vector.shape_cast %294 : vector<1xf32> to vector<1x1xf32>
    %296 = tpu.reciprocal %295 {approx = true} : vector<1x1xf32> -> vector<1x1xf32>
    %297 = arith.mulf %293, %296 : vector<1x1xf32>
    %cst_131 = arith.constant dense<0.000000e+00> : vector<1x32xf32>
    %298 = tpu.matmul %297, %288, %cst_131 {dimension_numbers = #tpu.dot_dimension_numbers<[1], [0], [0], [1], [0, 0, 1, 1], [], []>} : vector<1x1xf32>, vector<1x32xf32>, vector<1x32xf32> -> vector<1x32xf32>
    %299 = arith.truncf %298 : vector<1x32xf32> to vector<1x32xbf16>
    %c2_132 = arith.constant 2 : index
    %c96_133 = arith.constant 96 : index
    %c384_134 = arith.constant 384 : index
    %300 = vector.load %arg2[%c2_132, %c96_133, %c384_134] : memref<3x128x512xbf16, #tpu.memory_space<vmem>>, vector<1x32x128xbf16>
    %301 = vector.shape_cast %300 : vector<1x32x128xbf16> to vector<32x128xbf16>
    %cst_135 = arith.constant dense<0.000000e+00> : vector<1x128xf32>
    %302 = tpu.matmul %299, %301, %cst_135 {dimension_numbers = #tpu.dot_dimension_numbers<[1], [0], [0], [1], [0, 0, 1, 1], [], []>} : vector<1x32xbf16>, vector<32x128xbf16>, vector<1x128xf32> -> vector<1x128xf32>
    %303 = arith.addf %285, %302 : vector<1x128xf32>
    %cst_136 = arith.constant 0.000000e+00 : f32
    %304 = vector.broadcast %cst_136 : f32 to vector<1x128xf32>
    %305 = arith.maximumf %303, %304 : vector<1x128xf32>
    %306 = arith.truncf %305 : vector<1x128xf32> to vector<1x128xbf16>
    tpu.wait_dma2 semaphore(%arg7 : memref<!tpu.dma_semaphore, #tpu.memory_space<semaphore_mem>>) src(%arg4 : memref<512x128xbf16, #tpu.memory_space<any>>) dst(%arg6 : memref<512x128xbf16, #tpu.memory_space<vmem>>)
    %c0_137 = arith.constant 0 : index
    %c0_138 = arith.constant 0 : index
    %307 = vector.load %arg6[%c0_137, %c0_138] : memref<512x128xbf16, #tpu.memory_space<vmem>>, vector<128x128xbf16>
    %cst_139 = arith.constant dense<0.000000e+00> : vector<1x128xf32>
    %308 = tpu.matmul %123, %307, %cst_139 {dimension_numbers = #tpu.dot_dimension_numbers<[1], [0], [0], [1], [0, 0, 1, 1], [], []>} : vector<1x128xbf16>, vector<128x128xbf16>, vector<1x128xf32> -> vector<1x128xf32>
    %c128 = arith.constant 128 : index
    %c0_140 = arith.constant 0 : index
    %309 = vector.load %arg6[%c128, %c0_140] : memref<512x128xbf16, #tpu.memory_space<vmem>>, vector<128x128xbf16>
    %cst_141 = arith.constant dense<0.000000e+00> : vector<1x128xf32>
    %310 = tpu.matmul %219, %309, %cst_141 {dimension_numbers = #tpu.dot_dimension_numbers<[1], [0], [0], [1], [0, 0, 1, 1], [], []>} : vector<1x128xbf16>, vector<128x128xbf16>, vector<1x128xf32> -> vector<1x128xf32>
    %311 = arith.addf %308, %310 : vector<1x128xf32>
    %c256 = arith.constant 256 : index
    %c0_142 = arith.constant 0 : index
    %312 = vector.load %arg6[%c256, %c0_142] : memref<512x128xbf16, #tpu.memory_space<vmem>>, vector<128x128xbf16>
    %cst_143 = arith.constant dense<0.000000e+00> : vector<1x128xf32>
    %313 = tpu.matmul %306, %312, %cst_143 {dimension_numbers = #tpu.dot_dimension_numbers<[1], [0], [0], [1], [0, 0, 1, 1], [], []>} : vector<1x128xbf16>, vector<128x128xbf16>, vector<1x128xf32> -> vector<1x128xf32>
    %314 = arith.addf %311, %313 : vector<1x128xf32>
    %c1_144 = arith.constant 1 : index
    %c0_145 = arith.constant 0 : index
    %c512_146 = arith.constant 512 : index
    %315 = vector.load %arg3[%c1_144, %c0_145, %c512_146] : memref<3x1x640xf32, #tpu.memory_space<vmem>>, vector<1x1x128xf32>
    %316 = vector.shape_cast %315 : vector<1x1x128xf32> to vector<1x128xf32>
    %317 = arith.addf %314, %316 : vector<1x128xf32>
    %cst_147 = arith.constant 0.000000e+00 : f32
    %318 = vector.broadcast %cst_147 : f32 to vector<1x128xf32>
    %319 = arith.maximumf %317, %318 : vector<1x128xf32>
    %320 = arith.truncf %319 : vector<1x128xf32> to vector<1x128xbf16>
    %c384_148 = arith.constant 384 : index
    %c0_149 = arith.constant 0 : index
    %321 = vector.load %arg6[%c384_148, %c0_149] : memref<512x128xbf16, #tpu.memory_space<vmem>>, vector<128x128xbf16>
    %cst_150 = arith.constant dense<0.000000e+00> : vector<1x128xf32>
    %322 = tpu.matmul %320, %321, %cst_150 {dimension_numbers = #tpu.dot_dimension_numbers<[1], [0], [0], [1], [0, 0, 1, 1], [], []>} : vector<1x128xbf16>, vector<128x128xbf16>, vector<1x128xf32> -> vector<1x128xf32>
    %c2_151 = arith.constant 2 : index
    %c0_152 = arith.constant 0 : index
    %c512_153 = arith.constant 512 : index
    %323 = vector.load %arg3[%c2_151, %c0_152, %c512_153] : memref<3x1x640xf32, #tpu.memory_space<vmem>>, vector<1x1x128xf32>
    %324 = vector.shape_cast %323 : vector<1x1x128xf32> to vector<1x128xf32>
    %325 = arith.addf %322, %324 : vector<1x128xf32>
    %c0_154 = arith.constant 0 : index
    %c0_155 = arith.constant 0 : index
    %326 = vector.load %arg5[%c0_154, %c0_155] : memref<1x128xf32, #tpu.memory_space<vmem>>, vector<1x128xf32>
    tpu.vector_store %arg5[%c0_154, %c0_155], %325 {strides = array<i32>} : memref<1x128xf32, #tpu.memory_space<vmem>>, vector<1x128xf32>,
    return
  }
}

</mosaic_0001>

<llo_original>
// kernel: pkanet_forward.1
$region0: #{pkanet_forward.1}
  #allocation0 [shape = 'u32[]', space=smem, size = 0x4, offset = 0x4, fixed_abs, tag = 'smem constant byte address 0x4 - core index']
  #allocation1 [shape = 'u32[72,128]{1,0:T(1,128)}', space=vmem, size = 0x9000, scoped, tag = 'internal scratch']
  #allocation2 [shape = 'bf16[512,128]{1,0:T(8,128)(2,1)}', space=vmem, size = 0x20000, scoped, tag = 'scratch operand']
  #allocation3 [shape = 's32[1]{0}', space=sflag, size = 0x4, scoped, tag = 'scratch operand']
  #allocation13 [shape = 's32[]', space=sflag, size = 0x4, offset = 0, fixed_abs, tag = 'sflag constant byte address 0x0 - dummy sync flag']
  #allocation14 [shape = 's32[]', space=sflag, size = 0x4, offset = 0, fixed_abs, tag = 'sflag constant byte address 0x0 - dummy sync flag']
  #allocation15 [shape = 'u32[]', space=smem, size = 0x4, offset = 0x44, fixed_abs, tag = 'smem constant byte address 0x44 - assertion arg 0']
  #allocation16 [shape = 'u32[]', space=smem, size = 0x4, offset = 0x48, fixed_abs, tag = 'smem constant byte address 0x48 - assertion arg 1']
  %s0 = inlined_call_operand.hbm [shape: f32[3,8,128], index: 0, kind: input, shape index: {}]
  %s1 = inlined_call_operand.hbm [shape: f32[3,128,128], index: 1, kind: input, shape index: {}]
  %s2 = inlined_call_operand.hbm [shape: bf16[3,128,512], index: 2, kind: input, shape index: {}]
  %s3 = inlined_call_operand.hbm [shape: f32[3,1,640], index: 3, kind: input, shape index: {}]
  %s4 = inlined_call_operand.hbm [shape: bf16[512,128], index: 4, kind: input, shape index: {}]
  %s5 = inlined_call_operand.hbm [shape: f32[1,128], index: 5, kind: output, shape index: {}]
  %s6 = sld [smem:[#allocation0]]
  $region46: #{pkanet_forward.1} parent=0
    _
  %s8 = ssub.s32 1, %s6
  %s9 = scalar_select 0, %s8, %s6
  $region1: #{pkanet_forward.1} parent=0
    #allocation4 [shape = 'u8[12288]{0}', space=vmem, size = 0x3000, scoped, tag = 'input window, operand 0, single buffered']
    #allocation5 [shape = 's32[1]{0}', space=sflag, size = 0x4, scoped, tag = 'scoped memory for pkanet_forward.1']
    #allocation6 [shape = 's32[1]{0}', space=sflag, size = 0x4, scoped, tag = 'scoped memory for pkanet_forward.1']
    #allocation7 [shape = 'u8[196608]{0}', space=vmem, size = 0x30000, scoped, tag = 'input window, operand 1, single buffered']
    #allocation8 [shape = 's32[1]{0}', space=sflag, size = 0x4, scoped, tag = 'scoped memory for pkanet_forward.1']
    #allocation9 [shape = 'u8[393216]{0}', space=vmem, size = 0x60000, scoped, tag = 'input window, operand 2, single buffered']
    #allocation10 [shape = 'u8[7680]{0}', space=vmem, size = 0x2000, scoped, tag = 'input window, operand 3, single buffered']
    #allocation11 [shape = 's32[1]{0}', space=sflag, size = 0x4, scoped, tag = 'scoped memory for pkanet_forward.1']
    #allocation12 [shape = 'u8[512]{0}', space=vmem, size = 0x400, scoped, tag = 'output window, operand 0, single buffered']
    %10 = vsyncpa [#allocation5], 0
    %11 = vsyncpa [#allocation8], 0
    %12 = vsyncpa [#allocation11], 0
    %13 = vsyncpa [#allocation6], 0
    // Predicated region
    $region2: #{pkanet_forward.1} parent=1 // pred_check
      _
    $region3: #{pkanet_forward.1} parent=1 // pred_check_branch
      %15 = sbr.rel (0) target = $region5
    $region4: #{pkanet_forward.1} parent=1 // pred_region
      %17 = vsyncadd [#allocation5], 0
      %s18 = sshll.u32 %s0, 4
      %s19 = int_to_ptr.hbm [resolvable:$true] %s18
      %s20 = sshll.u32 [#allocation4], 4
      %s21 = int_to_ptr.vmem [resolvable:$true] %s20
      %26 = dma.hbm_to_vmem [thread:$0]  %s19, 384, %s21, [#allocation5], 128, 128, 8
    $region5: #{pkanet_forward.1} parent=1 // pred_fallthru
      _
    // Predicated region
    $region6: #{pkanet_forward.1} parent=1 // pred_check
      _
    $region7: #{pkanet_forward.1} parent=1 // pred_check_branch
      %28 = sbr.rel (0) target = $region9
    $region8: #{pkanet_forward.1} parent=1 // pred_region
      %30 = vsyncadd [#allocation8], 0
      %s31 = sshll.u32 %s1, 4
      %s32 = int_to_ptr.hbm [resolvable:$true] %s31
      %s33 = sshll.u32 [#allocation7], 4
      %s34 = int_to_ptr.vmem [resolvable:$true] %s33
      %39 = dma.hbm_to_vmem [thread:$0]  %s32, 6144, %s34, [#allocation8], 128, 128, 8
    $region9: #{pkanet_forward.1} parent=1 // pred_fallthru
      _
    // Predicated region
    $region10: #{pkanet_forward.1} parent=1 // pred_check
      _
    $region11: #{pkanet_forward.1} parent=1 // pred_check_branch
      %41 = sbr.rel (0) target = $region13
    $region12: #{pkanet_forward.1} parent=1 // pred_region
      %43 = vsyncadd [#allocation8], 0
      %s44 = sshll.u32 %s2, 4
      %s45 = int_to_ptr.hbm [resolvable:$true] %s44
      %s46 = sshll.u32 [#allocation9], 4
      %s47 = int_to_ptr.vmem [resolvable:$true] %s46
      %52 = dma.hbm_to_vmem [thread:$0]  %s45, 12288, %s47, [#allocation8], 256, 256, 16
    $region13: #{pkanet_forward.1} parent=1 // pred_fallthru
      _
    // Predicated region
    $region14: #{pkanet_forward.1} parent=1 // pred_check
      _
    $region15: #{pkanet_forward.1} parent=1 // pred_check_branch
      %54 = sbr.rel (0) target = $region17
    $region16: #{pkanet_forward.1} parent=1 // pred_region
      %56 = vsyncadd [#allocation11], 0
      %s57 = sshll.u32 %s3, 4
      %s58 = int_to_ptr.hbm [resolvable:$true] %s57
      %s59 = sshll.u32 [#allocation10], 4
      %s60 = int_to_ptr.vmem [resolvable:$true] %s59
      %65 = dma.hbm_to_vmem [thread:$0]  %s58, 240, %s60, [#allocation11], 80, 80, 5
    $region17: #{pkanet_forward.1} parent=1 // pred_fallthru
      _
    // Predicated region
    $region18: #{pkanet_forward.1} parent=1 // pred_check
      _
    $region19: #{pkanet_forward.1} parent=1 // pred_check_branch
      %67 = sbr.rel (0) target = $region21
    $region20: #{pkanet_forward.1} parent=1 // pred_region
      %69 = dma.done [#allocation5], 384
    $region21: #{pkanet_forward.1} parent=1 // pred_fallthru
      _
    // Predicated region
    $region22: #{pkanet_forward.1} parent=1 // pred_check
      _
    $region23: #{pkanet_forward.1} parent=1 // pred_check_branch
      %71 = sbr.rel (0) target = $region25
    $region24: #{pkanet_forward.1} parent=1 // pred_region
      %73 = dma.done [#allocation8], 6144
    $region25: #{pkanet_forward.1} parent=1 // pred_fallthru
      _
    // Predicated region
    $region26: #{pkanet_forward.1} parent=1 // pred_check
      _
    $region27: #{pkanet_forward.1} parent=1 // pred_check_branch
      %75 = sbr.rel (0) target = $region29
    $region28: #{pkanet_forward.1} parent=1 // pred_region
      %77 = dma.done [#allocation8], 12288
    $region29: #{pkanet_forward.1} parent=1 // pred_fallthru
      _
    // Predicated region
    $region30: #{pkanet_forward.1} parent=1 // pred_check
      _
    $region31: #{pkanet_forward.1} parent=1 // pred_check_branch
      %79 = sbr.rel (0) target = $region33
    $region32: #{pkanet_forward.1} parent=1 // pred_region
      %81 = dma.done [#allocation11], 240
    $region33: #{pkanet_forward.1} parent=1 // pred_fallthru
      _
    // Predicated region
    $region34: #{pkanet_forward.1} parent=1 // pred_check
      _
    $region35: #{pkanet_forward.1} parent=1 // pred_check_branch
      %84 = sbr.rel target = $region37
    $region36: #{pkanet_forward.1} parent=1 // pred_region
      %85 = sst [smem:[#allocation15]] [#allocation14]
      %86 = sst [smem:[#allocation16]] [#allocation13]
    $region37: #{pkanet_forward.1} parent=1 // pred_fallthru
      _
    %88 = shalt.err (0)
    %s90 = sshll.u32 %s4, 4
    %s91 = int_to_ptr.hbm [resolvable:$true] %s90
    %s92 = sshll.u32 [#allocation2], 4
    %s93 = int_to_ptr.vmem [resolvable:$true] %s92
    %95 = dma.hbm_to_vmem [thread:$0]  %s91, 4096, %s93, [#allocation3]
    %v96 = vld [vmem:[#allocation10 + $0x4] sm:$0x1]
    %v97 = vld [vmem:[#allocation4] sm:$0xff]
    %v98 = vld [vmem:[#allocation7] sm:$0xff]
    %v99 = vld [vmem:[#allocation7 + $0x8] sm:$0xff]
    %v100 = vld [vmem:[#allocation7 + $0x10] sm:$0xff]
    %v101 = vld [vmem:[#allocation7 + $0x18] sm:$0xff]
    %v102 = vld [vmem:[#allocation7 + $0x20] sm:$0xff]
    %v103 = vld [vmem:[#allocation7 + $0x28] sm:$0xff]
    %v104 = vld [vmem:[#allocation7 + $0x30] sm:$0xff]
    %v105 = vld [vmem:[#allocation7 + $0x38] sm:$0xff]
    %v106 = vld [vmem:[#allocation7 + $0x40] sm:$0xff]
    %v107 = vld [vmem:[#allocation7 + $0x48] sm:$0xff]
    %v108 = vld [vmem:[#allocation7 + $0x50] sm:$0xff]
    %v109 = vld [vmem:[#allocation7 + $0x58] sm:$0xff]
    %v110 = vld [vmem:[#allocation7 + $0x60] sm:$0xff]
    %v111 = vld [vmem:[#allocation7 + $0x68] sm:$0xff]
    %v112 = vld [vmem:[#allocation7 + $0x70] sm:$0xff]
    %v113 = vld [vmem:[#allocation7 + $0x78] sm:$0xff]
    %114 = vmatpush.msra.mxu0 %v113
    %115 = vmatpush.msra.mxu0 %v112
    %116 = vmatpush.msra.mxu0 %v111
    %117 = vmatpush.msra.mxu0 %v110
    %118 = vmatpush.msra.mxu0 %v109
    %119 = vmatpush.msra.mxu0 %v108
    %120 = vmatpush.msra.mxu0 %v107
    %121 = vmatpush.msra.mxu0 %v106
    %122 = vmatpush.msra.mxu0 %v105
    %123 = vmatpush.msra.mxu0 %v104
    %124 = vmatpush.msra.mxu0 %v103
    %125 = vmatpush.msra.mxu0 %v102
    %126 = vmatpush.msra.mxu0 %v101
    %127 = vmatpush.msra.mxu0 %v100
    %128 = vmatpush.msra.mxu0 %v99
    %129 = vmatpush.msra.mxu0 %v98
    %130 = vmatmul.f32.gmra.mxu0 %v97
    %v131 = vpop.f32.mrf.mxu0
    %v132 = vadd.f32 0.0, %v131
    %133 = vdwg.mxu0
    %s134 = scalar_lea.vmem [#allocation4], 8
    %v135 = vld [vmem:[%s134] sm:$0xff]
    %s136 = scalar_lea.vmem [#allocation7], 128
    %v137 = vld [vmem:[%s136] sm:$0xff]
    %v138 = vld [vmem:[%s136 + $0x8] sm:$0xff]
    %v139 = vld [vmem:[%s136 + $0x10] sm:$0xff]
    %v140 = vld [vmem:[%s136 + $0x18] sm:$0xff]
    %v141 = vld [vmem:[%s136 + $0x20] sm:$0xff]
    %v142 = vld [vmem:[%s136 + $0x28] sm:$0xff]
    %v143 = vld [vmem:[%s136 + $0x30] sm:$0xff]
    %v144 = vld [vmem:[%s136 + $0x38] sm:$0xff]
    %v145 = vld [vmem:[%s136 + $0x40] sm:$0xff]
    %v146 = vld [vmem:[%s136 + $0x48] sm:$0xff]
    %v147 = vld [vmem:[%s136 + $0x50] sm:$0xff]
    %v148 = vld [vmem:[%s136 + $0x58] sm:$0xff]
    %v149 = vld [vmem:[%s136 + $0x60] sm:$0xff]
    %v150 = vld [vmem:[%s136 + $0x68] sm:$0xff]
    %v151 = vld [vmem:[%s136 + $0x70] sm:$0xff]
    %v152 = vld [vmem:[%s136 + $0x78] sm:$0xff]
    %153 = vmatpush.msra.mxu0 %v152
    %154 = vmatpush.msra.mxu0 %v151
    %155 = vmatpush.msra.mxu0 %v150
    %156 = vmatpush.msra.mxu0 %v149
    %157 = vmatpush.msra.mxu0 %v148
    %158 = vmatpush.msra.mxu0 %v147
    %159 = vmatpush.msra.mxu0 %v146
    %160 = vmatpush.msra.mxu0 %v145
    %161 = vmatpush.msra.mxu0 %v144
    %162 = vmatpush.msra.mxu0 %v143
    %163 = vmatpush.msra.mxu0 %v142
    %164 = vmatpush.msra.mxu0 %v141
    %165 = vmatpush.msra.mxu0 %v140
    %166 = vmatpush.msra.mxu0 %v139
    %167 = vmatpush.msra.mxu0 %v138
    %168 = vmatpush.msra.mxu0 %v137
    %169 = vmatmul.f32.gmra.mxu0 %v135
    %v170 = vpop.f32.mrf.mxu0
    %v171 = vadd.f32 0.0, %v170
    %172 = vdwg.mxu0
    %s173 = scalar_lea.vmem [#allocation4], 16
    %v174 = vld [vmem:[%s173] sm:$0xff]
    %s175 = scalar_lea.vmem [#allocation7], 256
    %v176 = vld [vmem:[%s175] sm:$0xff]
    %v177 = vld [vmem:[%s175 + $0x8] sm:$0xff]
    %v178 = vld [vmem:[%s175 + $0x10] sm:$0xff]
    %v179 = vld [vmem:[%s175 + $0x18] sm:$0xff]
    %v180 = vld [vmem:[%s175 + $0x20] sm:$0xff]
    %v181 = vld [vmem:[%s175 + $0x28] sm:$0xff]
    %v182 = vld [vmem:[%s175 + $0x30] sm:$0xff]
    %v183 = vld [vmem:[%s175 + $0x38] sm:$0xff]
    %v184 = vld [vmem:[%s175 + $0x40] sm:$0xff]
    %v185 = vld [vmem:[%s175 + $0x48] sm:$0xff]
    %v186 = vld [vmem:[%s175 + $0x50] sm:$0xff]
    %v187 = vld [vmem:[%s175 + $0x58] sm:$0xff]
    %v188 = vld [vmem:[%s175 + $0x60] sm:$0xff]
    %v189 = vld [vmem:[%s175 + $0x68] sm:$0xff]
    %v190 = vld [vmem:[%s175 + $0x70] sm:$0xff]
    %v191 = vld [vmem:[%s175 + $0x78] sm:$0xff]
    %192 = vmatpush.msra.mxu0 %v191
    %193 = vmatpush.msra.mxu0 %v190
    %194 = vmatpush.msra.mxu0 %v189
    %195 = vmatpush.msra.mxu0 %v188
    %196 = vmatpush.msra.mxu0 %v187
    %197 = vmatpush.msra.mxu0 %v186
    %198 = vmatpush.msra.mxu0 %v185
    %199 = vmatpush.msra.mxu0 %v184
    %200 = vmatpush.msra.mxu0 %v183
    %201 = vmatpush.msra.mxu0 %v182
    %202 = vmatpush.msra.mxu0 %v181
    %203 = vmatpush.msra.mxu0 %v180
    %204 = vmatpush.msra.mxu0 %v179
    %205 = vmatpush.msra.mxu0 %v178
    %206 = vmatpush.msra.mxu0 %v177
    %207 = vmatpush.msra.mxu0 %v176
    %208 = vmatmul.f32.gmra.mxu0 %v174
    %v209 = vpop.f32.mrf.mxu0
    %v210 = vadd.f32 0.0, %v209
    %211 = vdwg.mxu0
    %v212 = vmul.f32 %v132, 128.0
    %v214 = vperm.slane %v96, 0
    %v216 = vadd.f32 %v212, %v214
    %v217 = vmul.f32 %v171, 128.0
    %v218 = vadd.f32 %v217, %v214
    %v219 = vld [vmem:[#allocation10] sm:$0x1f]
    %v220 = vpack.c.bf16 %v216, %v216
    %v221 = vld [vmem:[#allocation9] sm:$0xff]
    %v222 = vld [vmem:[#allocation9 + $0x8] sm:$0xf]
    %v223 = vld [vmem:[#allocation9 + $0x10] sm:$0xff]
    %v224 = vld [vmem:[#allocation9 + $0x18] sm:$0xf]
    %v225 = vld [vmem:[#allocation9 + $0x20] sm:$0xff]
    %v226 = vld [vmem:[#allocation9 + $0x28] sm:$0xf]
    %v227 = vld [vmem:[#allocation9 + $0x30] sm:$0xff]
    %v228 = vld [vmem:[#allocation9 + $0x38] sm:$0xf]
    %v229 = vld [vmem:[#allocation9 + $0x40] sm:$0xff]
    %v230 = vld [vmem:[#allocation9 + $0x48] sm:$0xf]
    %v231 = vld [vmem:[#allocation9 + $0x50] sm:$0xff]
    %v232 = vld [vmem:[#allocation9 + $0x58] sm:$0xf]
    %v233 = vld [vmem:[#allocation9 + $0x60] sm:$0xff]
    %v234 = vld [vmem:[#allocation9 + $0x68] sm:$0xf]
    %v235 = vld [vmem:[#allocation9 + $0x70] sm:$0xff]
    %v236 = vld [vmem:[#allocation9 + $0x78] sm:$0xf]
    %v237 = vld [vmem:[#allocation9 + $0x80] sm:$0xff]
    %v238 = vld [vmem:[#allocation9 + $0x88] sm:$0xf]
    %v239 = vld [vmem:[#allocation9 + $0x90] sm:$0xff]
    %v240 = vld [vmem:[#allocation9 + $0x98] sm:$0xf]
    %v241 = vld [vmem:[#allocation9 + $0xa0] sm:$0xff]
    %v242 = vld [vmem:[#allocation9 + $0xa8] sm:$0xf]
    %v243 = vld [vmem:[#allocation9 + $0xb0] sm:$0xff]
    %v244 = vld [vmem:[#allocation9 + $0xb8] sm:$0xf]
    %v245 = vld [vmem:[#allocation9 + $0xc0] sm:$0xff]
    %v246 = vld [vmem:[#allocation9 + $0xc8] sm:$0xf]
    %v247 = vld [vmem:[#allocation9 + $0xd0] sm:$0xff]
    %v248 = vld [vmem:[#allocation9 + $0xd8] sm:$0xf]
    %v249 = vld [vmem:[#allocation9 + $0xe0] sm:$0xff]
    %v250 = vld [vmem:[#allocation9 + $0xe8] sm:$0xf]
    %v251 = vld [vmem:[#allocation9 + $0xf0] sm:$0xff]
    %v252 = vld [vmem:[#allocation9 + $0xf8] sm:$0xf]
    %v254 = vperm.slane %v219, 0
    %v255 = vperm.slane %v219, 1
    %v256 = vperm.slane %v219, 2
    %v292 = vunpack.c.l.b16 %v221
    %v293 = vunpack.c.h.b16 %v221
    %v294 = vunpack.c.l.b16 %v222
    %v295 = vunpack.c.l.b16 %v223
    %v296 = vunpack.c.h.b16 %v223
    %v297 = vunpack.c.l.b16 %v224
    %v298 = vunpack.c.l.b16 %v225
    %v299 = vunpack.c.h.b16 %v225
    %v300 = vunpack.c.l.b16 %v226
    %v301 = vunpack.c.l.b16 %v227
    %v302 = vunpack.c.h.b16 %v227
    %v303 = vunpack.c.l.b16 %v228
    %v304 = vunpack.c.l.b16 %v229
    %v305 = vunpack.c.h.b16 %v229
    %v306 = vunpack.c.l.b16 %v230
    %v307 = vunpack.c.l.b16 %v231
    %v308 = vunpack.c.h.b16 %v231
    %v309 = vunpack.c.l.b16 %v232
    %v310 = vunpack.c.l.b16 %v233
    %v311 = vunpack.c.h.b16 %v233
    %v312 = vunpack.c.l.b16 %v234
    %v313 = vunpack.c.l.b16 %v235
    %v314 = vunpack.c.h.b16 %v235
    %v315 = vunpack.c.l.b16 %v236
    %v316 = vunpack.c.l.b16 %v237
    %v317 = vunpack.c.h.b16 %v237
    %v318 = vunpack.c.l.b16 %v238
    %v319 = vunpack.c.l.b16 %v239
    %v320 = vunpack.c.h.b16 %v239
    %v321 = vunpack.c.l.b16 %v240
    %v322 = vunpack.c.l.b16 %v241
    %v323 = vunpack.c.h.b16 %v241
    %v324 = vunpack.c.l.b16 %v242
    %v325 = vunpack.c.l.b16 %v243
    %v326 = vunpack.c.h.b16 %v243
    %v327 = vunpack.c.l.b16 %v244
    %v328 = vunpack.c.l.b16 %v245
    %v329 = vunpack.c.h.b16 %v245
    %v330 = vunpack.c.l.b16 %v246
    %v331 = vunpack.c.l.b16 %v247
    %v332 = vunpack.c.h.b16 %v247
    %v333 = vunpack.c.l.b16 %v248
    %v334 = vunpack.c.l.b16 %v249
    %v335 = vunpack.c.h.b16 %v249
    %v336 = vunpack.c.l.b16 %v250
    %v337 = vunpack.c.l.b16 %v251
    %v338 = vunpack.c.h.b16 %v251
    %v339 = vunpack.c.l.b16 %v252
    %v340 = vpack.c.b16 %v295, %v292
    %v341 = vpack.c.b16 %v296, %v293
    %v342 = vpack.c.b16 %v297, %v294
    %v343 = vpack.c.b16 %v301, %v298
    %v344 = vpack.c.b16 %v302, %v299
    %v345 = vpack.c.b16 %v303, %v300
    %v346 = vpack.c.b16 %v307, %v304
    %v347 = vpack.c.b16 %v308, %v305
    %v348 = vpack.c.b16 %v309, %v306
    %v349 = vpack.c.b16 %v313, %v310
    %v350 = vpack.c.b16 %v314, %v311
    %v351 = vpack.c.b16 %v315, %v312
    %v352 = vpack.c.b16 %v319, %v316
    %v353 = vpack.c.b16 %v320, %v317
    %v354 = vpack.c.b16 %v321, %v318
    %v355 = vpack.c.b16 %v325, %v322
    %v356 = vpack.c.b16 %v326, %v323
    %v357 = vpack.c.b16 %v327, %v324
    %v358 = vpack.c.b16 %v331, %v328
    %v359 = vpack.c.b16 %v332, %v329
    %v360 = vpack.c.b16 %v333, %v330
    %v361 = vpack.c.b16 %v337, %v334
    %v362 = vpack.c.b16 %v338, %v335
    %v363 = vpack.c.b16 %v339, %v336
    %388 = vmatpush.bf16.msra.mxu0 %v361
    %389 = vmatpush.bf16.msra.mxu0 %v358
    %390 = vmatpush.bf16.msra.mxu0 %v355
    %391 = vmatpush.bf16.msra.mxu0 %v352
    %392 = vmatpush.bf16.msra.mxu0 %v349
    %393 = vmatpush.bf16.msra.mxu0 %v346
    %394 = vmatpush.bf16.msra.mxu0 %v343
    %395 = vmatpush.bf16.msra.mxu0 %v340
    %396 = vmatmul.bf16.gmra.mxu0 %v220
    %v397 = vpop.f32.mrf.mxu0
    %v398 = vadd.f32 %v254, %v397
    %v399 = vpop.f32.mrf.mxu0
    %400 = vdwg.mxu0
    %401 = vmatpush.bf16.msra.mxu0 %v362
    %402 = vmatpush.bf16.msra.mxu0 %v359
    %403 = vmatpush.bf16.msra.mxu0 %v356
    %404 = vmatpush.bf16.msra.mxu0 %v353
    %405 = vmatpush.bf16.msra.mxu0 %v350
    %406 = vmatpush.bf16.msra.mxu0 %v347
    %407 = vmatpush.bf16.msra.mxu0 %v344
    %408 = vmatpush.bf16.msra.mxu0 %v341
    %409 = vmatmul.bf16.gmra.mxu0 %v220
    %v410 = vpop.f32.mrf.mxu0
    %v411 = vadd.f32 %v255, %v410
    %v412 = vpop.f32.mrf.mxu0
    %413 = vdwg.mxu0
    %414 = vmatpush.bf16.msra.mxu0 %v363
    %415 = vmatpush.bf16.msra.mxu0 %v360
    %416 = vmatpush.bf16.msra.mxu0 %v357
    %417 = vmatpush.bf16.msra.mxu0 %v354
    %418 = vmatpush.bf16.msra.mxu0 %v351
    %419 = vmatpush.bf16.msra.mxu0 %v348
    %420 = vmatpush.bf16.msra.mxu0 %v345
    %421 = vmatpush.bf16.msra.mxu0 %v342
    %422 = vmatmul.bf16.gmra.mxu0 %v220
    %v423 = vpop.f32.mrf.mxu0
    %v424 = vadd.f32 %v256, %v423
    %v425 = vpop.f32.mrf.mxu0
    %426 = vdwg.mxu0
    %v428 = vrot.slane %v398, 2
    %vm429 = vcmask 261120
    %v430 = vsel %vm429, %v428, 0
    %v433 = vsel %vm429, %v411, 0
    %435 = vmatpush.xpose.msra.mxu0 0.0
    %436 = vmatpush.xpose.msra.mxu0 0.0
    %437 = vmatpush.xpose.msra.mxu0 0.0
    %438 = vmatpush.xpose.msra.mxu0 0.0
    %439 = vmatpush.xpose.msra.mxu0 0.0
    %440 = vmatpush.xpose.msra.mxu0 0.0
    %441 = vmatpush.xpose.msra.mxu0 0.0
    %442 = vmatpush.xpose.msra.mxu0 0.0
    %443 = vmatpush.xpose.msra.mxu0 0.0
    %444 = vmatpush.xpose.msra.mxu0 0.0
    %445 = vmatpush.xpose.msra.mxu0 0.0
    %446 = vmatpush.xpose.msra.mxu0 0.0
    %447 = vmatpush.xpose.msra.mxu0 0.0
    %448 = vmatpush.xpose.msra.mxu0 0.0
    %449 = vmatpush.xpose.msra.mxu0 0.0
    %450 = vmatpush.xpose.msra.mxu0 %v433
    %451 = vmatmul.f32.gmra.mxu0 %v430
    %v452 = vpop.f32.mrf.mxu0
    %v453 = vadd.f32 0.0, %v452
    %454 = vdwg.mxu0
    %vm455 = vcmask 16384
    %v456 = vsel %vm455, %v453, -inf
    %457 = vmax.xlane.f32.xlu0 %v456
    %v458 = vpop.xlane.xlu0 %457
    %v459 = vsub.f32 %v453, %v458
    %v460 = vmul.f32 %v459, 1.442695
    %v461 = vpow.pop %v460
    %v462 = vsel %vm455, %v461, 0.0
    %463 = vadd.xlane.f32.xlu0 %v462
    %v464 = vpop.xlane.xlu0 %463
    %v465 = vrcp.pop %v464
    %v466 = vmul.f32 %v461, %v465
    %vm467 = vcmask 23552
    %v469 = vsel %vm467, %v466, 0
    %vm471 = vcmask 1042432
    %v473 = vsel %vm471, %v424, 0
    %475 = vmatpush.msra.mxu0 0.0
    %476 = vmatpush.msra.mxu0 0.0
    %477 = vmatpush.msra.mxu0 0.0
    %478 = vmatpush.msra.mxu0 0.0
    %479 = vmatpush.msra.mxu0 0.0
    %480 = vmatpush.msra.mxu0 0.0
    %481 = vmatpush.msra.mxu0 0.0
    %482 = vmatpush.msra.mxu0 0.0
    %483 = vmatpush.msra.mxu0 0.0
    %484 = vmatpush.msra.mxu0 0.0
    %485 = vmatpush.msra.mxu0 0.0
    %486 = vmatpush.msra.mxu0 0.0
    %487 = vmatpush.msra.mxu0 0.0
    %488 = vmatpush.msra.mxu0 0.0
    %489 = vmatpush.msra.mxu0 0.0
    %490 = vmatpush.msra.mxu0 %v473
    %491 = vmatmul.f32.gmra.mxu0 %v469
    %v492 = vpop.f32.mrf.mxu0
    %v493 = vadd.f32 0.0, %v492
    %494 = vdwg.mxu0
    %v495 = vpack.c.bf16 %v493, %v493
    %v496 = vld [vmem:[#allocation9 + $0xc] sm:$0xf]
    %v497 = vld [vmem:[#allocation9 + $0x1c] sm:$0xf]
    %v498 = vld [vmem:[#allocation9 + $0x2c] sm:$0xf]
    %v499 = vld [vmem:[#allocation9 + $0x3c] sm:$0xf]
    %v504 = vunpack.c.l.b16 %v496
    %v505 = vunpack.c.l.b16 %v497
    %v506 = vunpack.c.l.b16 %v498
    %v507 = vunpack.c.l.b16 %v499
    %v508 = vpack.c.b16 %v505, %v504
    %v509 = vpack.c.b16 %v507, %v506
    %v513 = vsel %vm429, %v495, 0
    %515 = vmatpush.bf16.msra.mxu0 0
    %516 = vmatpush.bf16.msra.mxu0 0
    %517 = vmatpush.bf16.msra.mxu0 0
    %518 = vmatpush.bf16.msra.mxu0 0
    %519 = vmatpush.bf16.msra.mxu0 0
    %520 = vmatpush.bf16.msra.mxu0 0
    %521 = vmatpush.bf16.msra.mxu0 %v509
    %522 = vmatpush.bf16.msra.mxu0 %v508
    %523 = vmatmul.bf16.gmra.mxu0 %v513
    %v524 = vpop.f32.mrf.mxu0
    %v525 = vadd.f32 0.0, %v524
    %v526 = vpop.f32.mrf.mxu0
    %527 = vdwg.mxu0
    %v528 = vrot.slane %v219, 3
    %v530 = vadd.f32 %v528, %v525
    %531 = vrot.lane.b32.xlu0 %v428, 96
    %v532 = vpop.permute.xlu0 %531
    %533 = vrot.lane.b32.xlu0 %v411, 96
    %v534 = vpop.permute.xlu0 %533
    %v535 = vsel %vm429, %v532, 0
    %v537 = vsel %vm429, %v534, 0
    %539 = vmatpush.xpose.msra.mxu0 0.0
    %540 = vmatpush.xpose.msra.mxu0 0.0
    %541 = vmatpush.xpose.msra.mxu0 0.0
    %542 = vmatpush.xpose.msra.mxu0 0.0
    %543 = vmatpush.xpose.msra.mxu0 0.0
    %544 = vmatpush.xpose.msra.mxu0 0.0
    %545 = vmatpush.xpose.msra.mxu0 0.0
    %546 = vmatpush.xpose.msra.mxu0 0.0
    %547 = vmatpush.xpose.msra.mxu0 0.0
    %548 = vmatpush.xpose.msra.mxu0 0.0
    %549 = vmatpush.xpose.msra.mxu0 0.0
    %550 = vmatpush.xpose.msra.mxu0 0.0
    %551 = vmatpush.xpose.msra.mxu0 0.0
    %552 = vmatpush.xpose.msra.mxu0 0.0
    %553 = vmatpush.xpose.msra.mxu0 0.0
    %554 = vmatpush.xpose.msra.mxu0 %v537
    %555 = vmatmul.f32.gmra.mxu0 %v535
    %v556 = vpop.f32.mrf.mxu0
    %v557 = vadd.f32 0.0, %v556
    %558 = vdwg.mxu0
    %v559 = vsel %vm455, %v557, -inf
    %560 = vmax.xlane.f32.xlu0 %v559
    %v561 = vpop.xlane.xlu0 %560
    %v562 = vsub.f32 %v557, %v561
    %v563 = vmul.f32 %v562, 1.442695
    %v564 = vpow.pop %v563
    %v565 = vsel %vm455, %v564, 0.0
    %566 = vadd.xlane.f32.xlu0 %v565
    %v567 = vpop.xlane.xlu0 %566
    %v568 = vrcp.pop %v567
    %v569 = vmul.f32 %v564, %v568
    %570 = vrot.lane.b32.xlu0 %v424, 96
    %v571 = vpop.permute.xlu0 %570
    %v573 = vsel %vm467, %v569, 0
    %v575 = vsel %vm471, %v571, 0
    %577 = vmatpush.msra.mxu0 0.0
    %578 = vmatpush.msra.mxu0 0.0
    %579 = vmatpush.msra.mxu0 0.0
    %580 = vmatpush.msra.mxu0 0.0
    %581 = vmatpush.msra.mxu0 0.0
    %582 = vmatpush.msra.mxu0 0.0
    %583 = vmatpush.msra.mxu0 0.0
    %584 = vmatpush.msra.mxu0 0.0
    %585 = vmatpush.msra.mxu0 0.0
    %586 = vmatpush.msra.mxu0 0.0
    %587 = vmatpush.msra.mxu0 0.0
    %588 = vmatpush.msra.mxu0 0.0
    %589 = vmatpush.msra.mxu0 0.0
    %590 = vmatpush.msra.mxu0 0.0
    %591 = vmatpush.msra.mxu0 0.0
    %592 = vmatpush.msra.mxu0 %v575
    %593 = vmatmul.f32.gmra.mxu0 %v573
    %v594 = vpop.f32.mrf.mxu0
    %v595 = vadd.f32 0.0, %v594
    %596 = vdwg.mxu0
    %v597 = vpack.c.bf16 %v595, %v595
    %v598 = vld [vmem:[#allocation9 + $0x4c] sm:$0xf]
    %v599 = vld [vmem:[#allocation9 + $0x5c] sm:$0xf]
    %v600 = vld [vmem:[#allocation9 + $0x6c] sm:$0xf]
    %v601 = vld [vmem:[#allocation9 + $0x7c] sm:$0xf]
    %v606 = vunpack.c.l.b16 %v598
    %v607 = vunpack.c.l.b16 %v599
    %v608 = vunpack.c.l.b16 %v600
    %v609 = vunpack.c.l.b16 %v601
    %v610 = vpack.c.b16 %v607, %v606
    %v611 = vpack.c.b16 %v609, %v608
    %v615 = vsel %vm429, %v597, 0
    %617 = vmatpush.bf16.msra.mxu0 0
    %618 = vmatpush.bf16.msra.mxu0 0
    %619 = vmatpush.bf16.msra.mxu0 0
    %620 = vmatpush.bf16.msra.mxu0 0
    %621 = vmatpush.bf16.msra.mxu0 0
    %622 = vmatpush.bf16.msra.mxu0 0
    %623 = vmatpush.bf16.msra.mxu0 %v611
    %624 = vmatpush.bf16.msra.mxu0 %v610
    %625 = vmatmul.bf16.gmra.mxu0 %v615
    %v626 = vpop.f32.mrf.mxu0
    %v627 = vadd.f32 0.0, %v626
    %v628 = vpop.f32.mrf.mxu0
    %629 = vdwg.mxu0
    %v630 = vadd.f32 %v530, %v627
    %631 = vrot.lane.b32.xlu0 %v428, 64
    %v632 = vpop.permute.xlu0 %631
    %633 = vrot.lane.b32.xlu0 %v411, 64
    %v634 = vpop.permute.xlu0 %633
    %v635 = vsel %vm429, %v632, 0
    %v637 = vsel %vm429, %v634, 0
    %639 = vmatpush.xpose.msra.mxu0 0.0
    %640 = vmatpush.xpose.msra.mxu0 0.0
    %641 = vmatpush.xpose.msra.mxu0 0.0
    %642 = vmatpush.xpose.msra.mxu0 0.0
    %643 = vmatpush.xpose.msra.mxu0 0.0
    %644 = vmatpush.xpose.msra.mxu0 0.0
    %645 = vmatpush.xpose.msra.mxu0 0.0
    %646 = vmatpush.xpose.msra.mxu0 0.0
    %647 = vmatpush.xpose.msra.mxu0 0.0
    %648 = vmatpush.xpose.msra.mxu0 0.0
    %649 = vmatpush.xpose.msra.mxu0 0.0
    %650 = vmatpush.xpose.msra.mxu0 0.0
    %651 = vmatpush.xpose.msra.mxu0 0.0
    %652 = vmatpush.xpose.msra.mxu0 0.0
    %653 = vmatpush.xpose.msra.mxu0 0.0
    %654 = vmatpush.xpose.msra.mxu0 %v637
    %655 = vmatmul.f32.gmra.mxu0 %v635
    %v656 = vpop.f32.mrf.mxu0
    %v657 = vadd.f32 0.0, %v656
    %658 = vdwg.mxu0
    %v659 = vsel %vm455, %v657, -inf
    %660 = vmax.xlane.f32.xlu0 %v659
    %v661 = vpop.xlane.xlu0 %660
    %v662 = vsub.f32 %v657, %v661
    %v663 = vmul.f32 %v662, 1.442695
    %v664 = vpow.pop %v663
    %v665 = vsel %vm455, %v664, 0.0
    %666 = vadd.xlane.f32.xlu0 %v665
    %v667 = vpop.xlane.xlu0 %666
    %v668 = vrcp.pop %v667
    %v669 = vmul.f32 %v664, %v668
    %670 = vrot.lane.b32.xlu0 %v424, 64
    %v671 = vpop.permute.xlu0 %670
    %v673 = vsel %vm467, %v669, 0
    %v675 = vsel %vm471, %v671, 0
    %677 = vmatpush.msra.mxu0 0.0
    %678 = vmatpush.msra.mxu0 0.0
    %679 = vmatpush.msra.mxu0 0.0
    %680 = vmatpush.msra.mxu0 0.0
    %681 = vmatpush.msra.mxu0 0.0
    %682 = vmatpush.msra.mxu0 0.0
    %683 = vmatpush.msra.mxu0 0.0
    %684 = vmatpush.msra.mxu0 0.0
    %685 = vmatpush.msra.mxu0 0.0
    %686 = vmatpush.msra.mxu0 0.0
    %687 = vmatpush.msra.mxu0 0.0
    %688 = vmatpush.msra.mxu0 0.0
    %689 = vmatpush.msra.mxu0 0.0
    %690 = vmatpush.msra.mxu0 0.0
    %691 = vmatpush.msra.mxu0 0.0
    %692 = vmatpush.msra.mxu0 %v675
    %693 = vmatmul.f32.gmra.mxu0 %v673
    %v694 = vpop.f32.mrf.mxu0
    %v695 = vadd.f32 0.0, %v694
    %696 = vdwg.mxu0
    %v697 = vpack.c.bf16 %v695, %v695
    %v698 = vld [vmem:[#allocation9 + $0x8c] sm:$0xf]
    %v699 = vld [vmem:[#allocation9 + $0x9c] sm:$0xf]
    %v700 = vld [vmem:[#allocation9 + $0xac] sm:$0xf]
    %v701 = vld [vmem:[#allocation9 + $0xbc] sm:$0xf]
    %v706 = vunpack.c.l.b16 %v698
    %v707 = vunpack.c.l.b16 %v699
    %v708 = vunpack.c.l.b16 %v700
    %v709 = vunpack.c.l.b16 %v701
    %v710 = vpack.c.b16 %v707, %v706
    %v711 = vpack.c.b16 %v709, %v708
    %v715 = vsel %vm429, %v697, 0
    %717 = vmatpush.bf16.msra.mxu0 0
    %718 = vmatpush.bf16.msra.mxu0 0
    %719 = vmatpush.bf16.msra.mxu0 0
    %720 = vmatpush.bf16.msra.mxu0 0
    %721 = vmatpush.bf16.msra.mxu0 0
    %722 = vmatpush.bf16.msra.mxu0 0
    %723 = vmatpush.bf16.msra.mxu0 %v711
    %724 = vmatpush.bf16.msra.mxu0 %v710
    %725 = vmatmul.bf16.gmra.mxu0 %v715
    %v726 = vpop.f32.mrf.mxu0
    %v727 = vadd.f32 0.0, %v726
    %v728 = vpop.f32.mrf.mxu0
    %729 = vdwg.mxu0
    %v730 = vadd.f32 %v630, %v727
    %731 = vrot.lane.b32.xlu0 %v428, 32
    %v732 = vpop.permute.xlu0 %731
    %733 = vrot.lane.b32.xlu0 %v411, 32
    %v734 = vpop.permute.xlu0 %733
    %v735 = vsel %vm429, %v732, 0
    %v737 = vsel %vm429, %v734, 0
    %739 = vmatpush.xpose.msra.mxu0 0.0
    %740 = vmatpush.xpose.msra.mxu0 0.0
    %741 = vmatpush.xpose.msra.mxu0 0.0
    %742 = vmatpush.xpose.msra.mxu0 0.0
    %743 = vmatpush.xpose.msra.mxu0 0.0
    %744 = vmatpush.xpose.msra.mxu0 0.0
    %745 = vmatpush.xpose.msra.mxu0 0.0
    %746 = vmatpush.xpose.msra.mxu0 0.0
    %747 = vmatpush.xpose.msra.mxu0 0.0
    %748 = vmatpush.xpose.msra.mxu0 0.0
    %749 = vmatpush.xpose.msra.mxu0 0.0
    %750 = vmatpush.xpose.msra.mxu0 0.0
    %751 = vmatpush.xpose.msra.mxu0 0.0
    %752 = vmatpush.xpose.msra.mxu0 0.0
    %753 = vmatpush.xpose.msra.mxu0 0.0
    %754 = vmatpush.xpose.msra.mxu0 %v737
    %755 = vmatmul.f32.gmra.mxu0 %v735
    %v756 = vpop.f32.mrf.mxu0
    %v757 = vadd.f32 0.0, %v756
    %758 = vdwg.mxu0
    %v759 = vsel %vm455, %v757, -inf
    %760 = vmax.xlane.f32.xlu0 %v759
    %v761 = vpop.xlane.xlu0 %760
    %v762 = vsub.f32 %v757, %v761
    %v763 = vmul.f32 %v762, 1.442695
    %v764 = vpow.pop %v763
    %v765 = vsel %vm455, %v764, 0.0
    %766 = vadd.xlane.f32.xlu0 %v765
    %v767 = vpop.xlane.xlu0 %766
    %v768 = vrcp.pop %v767
    %v769 = vmul.f32 %v764, %v768
    %770 = vrot.lane.b32.xlu0 %v424, 32
    %v771 = vpop.permute.xlu0 %770
    %v773 = vsel %vm467, %v769, 0
    %v775 = vsel %vm471, %v771, 0
    %777 = vmatpush.msra.mxu0 0.0
    %778 = vmatpush.msra.mxu0 0.0
    %779 = vmatpush.msra.mxu0 0.0
    %780 = vmatpush.msra.mxu0 0.0
    %781 = vmatpush.msra.mxu0 0.0
    %782 = vmatpush.msra.mxu0 0.0
    %783 = vmatpush.msra.mxu0 0.0
    %784 = vmatpush.msra.mxu0 0.0
    %785 = vmatpush.msra.mxu0 0.0
    %786 = vmatpush.msra.mxu0 0.0
    %787 = vmatpush.msra.mxu0 0.0
    %788 = vmatpush.msra.mxu0 0.0
    %789 = vmatpush.msra.mxu0 0.0
    %790 = vmatpush.msra.mxu0 0.0
    %791 = vmatpush.msra.mxu0 0.0
    %792 = vmatpush.msra.mxu0 %v775
    %793 = vmatmul.f32.gmra.mxu0 %v773
    %v794 = vpop.f32.mrf.mxu0
    %v795 = vadd.f32 0.0, %v794
    %796 = vdwg.mxu0
    %v797 = vpack.c.bf16 %v795, %v795
    %v798 = vld [vmem:[#allocation9 + $0xcc] sm:$0xf]
    %v799 = vld [vmem:[#allocation9 + $0xdc] sm:$0xf]
    %v800 = vld [vmem:[#allocation9 + $0xec] sm:$0xf]
    %v801 = vld [vmem:[#allocation9 + $0xfc] sm:$0xf]
    %v806 = vunpack.c.l.b16 %v798
    %v807 = vunpack.c.l.b16 %v799
    %v808 = vunpack.c.l.b16 %v800
    %v809 = vunpack.c.l.b16 %v801
    %v810 = vpack.c.b16 %v807, %v806
    %v811 = vpack.c.b16 %v809, %v808
    %v815 = vsel %vm429, %v797, 0
    %817 = vmatpush.bf16.msra.mxu0 0
    %818 = vmatpush.bf16.msra.mxu0 0
    %819 = vmatpush.bf16.msra.mxu0 0
    %820 = vmatpush.bf16.msra.mxu0 0
    %821 = vmatpush.bf16.msra.mxu0 0
    %822 = vmatpush.bf16.msra.mxu0 0
    %823 = vmatpush.bf16.msra.mxu0 %v811
    %824 = vmatpush.bf16.msra.mxu0 %v810
    %825 = vmatmul.bf16.gmra.mxu0 %v815
    %v826 = vpop.f32.mrf.mxu0
    %v827 = vadd.f32 0.0, %v826
    %v828 = vpop.f32.mrf.mxu0
    %829 = vdwg.mxu0
    %v830 = vadd.f32 %v730, %v827
    %v831 = vmax.f32 %v830, 0.0
    %v832 = vpack.c.bf16 %v831, %v831
    %s833 = scalar_lea.vmem [#allocation10], 5
    %v834 = vld [vmem:[%s833] sm:$0x1f]
    %v835 = vpack.c.bf16 %v218, %v218
    %s836 = scalar_lea.vmem [#allocation9], 256
    %v837 = vld [vmem:[%s836] sm:$0xff]
    %v838 = vld [vmem:[%s836 + $0x8] sm:$0xf]
    %v839 = vld [vmem:[%s836 + $0x10] sm:$0xff]
    %v840 = vld [vmem:[%s836 + $0x18] sm:$0xf]
    %v841 = vld [vmem:[%s836 + $0x20] sm:$0xff]
    %v842 = vld [vmem:[%s836 + $0x28] sm:$0xf]
    %v843 = vld [vmem:[%s836 + $0x30] sm:$0xff]
    %v844 = vld [vmem:[%s836 + $0x38] sm:$0xf]
    %v845 = vld [vmem:[%s836 + $0x40] sm:$0xff]
    %v846 = vld [vmem:[%s836 + $0x48] sm:$0xf]
    %v847 = vld [vmem:[%s836 + $0x50] sm:$0xff]
    %v848 = vld [vmem:[%s836 + $0x58] sm:$0xf]
    %v849 = vld [vmem:[%s836 + $0x60] sm:$0xff]
    %v850 = vld [vmem:[%s836 + $0x68] sm:$0xf]
    %v851 = vld [vmem:[%s836 + $0x70] sm:$0xff]
    %v852 = vld [vmem:[%s836 + $0x78] sm:$0xf]
    %v853 = vld [vmem:[%s836 + $0x80] sm:$0xff]
    %v854 = vld [vmem:[%s836 + $0x88] sm:$0xf]
    %v855 = vld [vmem:[%s836 + $0x90] sm:$0xff]
    %v856 = vld [vmem:[%s836 + $0x98] sm:$0xf]
    %v857 = vld [vmem:[%s836 + $0xa0] sm:$0xff]
    %v858 = vld [vmem:[%s836 + $0xa8] sm:$0xf]
    %v859 = vld [vmem:[%s836 + $0xb0] sm:$0xff]
    %v860 = vld [vmem:[%s836 + $0xb8] sm:$0xf]
    %v861 = vld [vmem:[%s836 + $0xc0] sm:$0xff]
    %v862 = vld [vmem:[%s836 + $0xc8] sm:$0xf]
    %v863 = vld [vmem:[%s836 + $0xd0] sm:$0xff]
    %v864 = vld [vmem:[%s836 + $0xd8] sm:$0xf]
    %v865 = vld [vmem:[%s836 + $0xe0] sm:$0xff]
    %v866 = vld [vmem:[%s836 + $0xe8] sm:$0xf]
    %v867 = vld [vmem:[%s836 + $0xf0] sm:$0xff]
    %v868 = vld [vmem:[%s836 + $0xf8] sm:$0xf]
    %v870 = vperm.slane %v834, 0
    %v871 = vperm.slane %v834, 1
    %v872 = vperm.slane %v834, 2
    %v908 = vunpack.c.l.b16 %v837
    %v909 = vunpack.c.h.b16 %v837
    %v910 = vunpack.c.l.b16 %v838
    %v911 = vunpack.c.l.b16 %v839
    %v912 = vunpack.c.h.b16 %v839
    %v913 = vunpack.c.l.b16 %v840
    %v914 = vunpack.c.l.b16 %v841
    %v915 = vunpack.c.h.b16 %v841
    %v916 = vunpack.c.l.b16 %v842
    %v917 = vunpack.c.l.b16 %v843
    %v918 = vunpack.c.h.b16 %v843
    %v919 = vunpack.c.l.b16 %v844
    %v920 = vunpack.c.l.b16 %v845
    %v921 = vunpack.c.h.b16 %v845
    %v922 = vunpack.c.l.b16 %v846
    %v923 = vunpack.c.l.b16 %v847
    %v924 = vunpack.c.h.b16 %v847
    %v925 = vunpack.c.l.b16 %v848
    %v926 = vunpack.c.l.b16 %v849
    %v927 = vunpack.c.h.b16 %v849
    %v928 = vunpack.c.l.b16 %v850
    %v929 = vunpack.c.l.b16 %v851
    %v930 = vunpack.c.h.b16 %v851
    %v931 = vunpack.c.l.b16 %v852
    %v932 = vunpack.c.l.b16 %v853
    %v933 = vunpack.c.h.b16 %v853
    %v934 = vunpack.c.l.b16 %v854
    %v935 = vunpack.c.l.b16 %v855
    %v936 = vunpack.c.h.b16 %v855
    %v937 = vunpack.c.l.b16 %v856
    %v938 = vunpack.c.l.b16 %v857
    %v939 = vunpack.c.h.b16 %v857
    %v940 = vunpack.c.l.b16 %v858
    %v941 = vunpack.c.l.b16 %v859
    %v942 = vunpack.c.h.b16 %v859
    %v943 = vunpack.c.l.b16 %v860
    %v944 = vunpack.c.l.b16 %v861
    %v945 = vunpack.c.h.b16 %v861
    %v946 = vunpack.c.l.b16 %v862
    %v947 = vunpack.c.l.b16 %v863
    %v948 = vunpack.c.h.b16 %v863
    %v949 = vunpack.c.l.b16 %v864
    %v950 = vunpack.c.l.b16 %v865
    %v951 = vunpack.c.h.b16 %v865
    %v952 = vunpack.c.l.b16 %v866
    %v953 = vunpack.c.l.b16 %v867
    %v954 = vunpack.c.h.b16 %v867
    %v955 = vunpack.c.l.b16 %v868
    %v956 = vpack.c.b16 %v911, %v908
    %v957 = vpack.c.b16 %v912, %v909
    %v958 = vpack.c.b16 %v913, %v910
    %v959 = vpack.c.b16 %v917, %v914
    %v960 = vpack.c.b16 %v918, %v915
    %v961 = vpack.c.b16 %v919, %v916
    %v962 = vpack.c.b16 %v923, %v920
    %v963 = vpack.c.b16 %v924, %v921
    %v964 = vpack.c.b16 %v925, %v922
    %v965 = vpack.c.b16 %v929, %v926
    %v966 = vpack.c.b16 %v930, %v927
    %v967 = vpack.c.b16 %v931, %v928
    %v968 = vpack.c.b16 %v935, %v932
    %v969 = vpack.c.b16 %v936, %v933
    %v970 = vpack.c.b16 %v937, %v934
    %v971 = vpack.c.b16 %v941, %v938
    %v972 = vpack.c.b16 %v942, %v939
    %v973 = vpack.c.b16 %v943, %v940
    %v974 = vpack.c.b16 %v947, %v944
    %v975 = vpack.c.b16 %v948, %v945
    %v976 = vpack.c.b16 %v949, %v946
    %v977 = vpack.c.b16 %v953, %v950
    %v978 = vpack.c.b16 %v954, %v951
    %v979 = vpack.c.b16 %v955, %v952
    %1004 = vmatpush.bf16.msra.mxu0 %v977
    %1005 = vmatpush.bf16.msra.mxu0 %v974
    %1006 = vmatpush.bf16.msra.mxu0 %v971
    %1007 = vmatpush.bf16.msra.mxu0 %v968
    %1008 = vmatpush.bf16.msra.mxu0 %v965
    %1009 = vmatpush.bf16.msra.mxu0 %v962
    %1010 = vmatpush.bf16.msra.mxu0 %v959
    %1011 = vmatpush.bf16.msra.mxu0 %v956
    %1012 = vmatmul.bf16.gmra.mxu0 %v835
    %v1013 = vpop.f32.mrf.mxu0
    %v1014 = vadd.f32 %v870, %v1013
    %v1015 = vpop.f32.mrf.mxu0
    %1016 = vdwg.mxu0
    %1017 = vmatpush.bf16.msra.mxu0 %v978
    %1018 = vmatpush.bf16.msra.mxu0 %v975
    %1019 = vmatpush.bf16.msra.mxu0 %v972
    %1020 = vmatpush.bf16.msra.mxu0 %v969
    %1021 = vmatpush.bf16.msra.mxu0 %v966
    %1022 = vmatpush.bf16.msra.mxu0 %v963
    %1023 = vmatpush.bf16.msra.mxu0 %v960
    %1024 = vmatpush.bf16.msra.mxu0 %v957
    %1025 = vmatmul.bf16.gmra.mxu0 %v835
    %v1026 = vpop.f32.mrf.mxu0
    %v1027 = vadd.f32 %v871, %v1026
    %v1028 = vpop.f32.mrf.mxu0
    %1029 = vdwg.mxu0
    %1030 = vmatpush.bf16.msra.mxu0 %v979
    %1031 = vmatpush.bf16.msra.mxu0 %v976
    %1032 = vmatpush.bf16.msra.mxu0 %v973
    %1033 = vmatpush.bf16.msra.mxu0 %v970
    %1034 = vmatpush.bf16.msra.mxu0 %v967
    %1035 = vmatpush.bf16.msra.mxu0 %v964
    %1036 = vmatpush.bf16.msra.mxu0 %v961
    %1037 = vmatpush.bf16.msra.mxu0 %v958
    %1038 = vmatmul.bf16.gmra.mxu0 %v835
    %v1039 = vpop.f32.mrf.mxu0
    %v1040 = vadd.f32 %v872, %v1039
    %v1041 = vpop.f32.mrf.mxu0
    %1042 = vdwg.mxu0
    %v1044 = vrot.slane %v1014, 2
    %v1045 = vsel %vm429, %v1044, 0
    %v1048 = vsel %vm429, %v1027, 0
    %1050 = vmatpush.xpose.msra.mxu0 0.0
    %1051 = vmatpush.xpose.msra.mxu0 0.0
    %1052 = vmatpush.xpose.msra.mxu0 0.0
    %1053 = vmatpush.xpose.msra.mxu0 0.0
    %1054 = vmatpush.xpose.msra.mxu0 0.0
    %1055 = vmatpush.xpose.msra.mxu0 0.0
    %1056 = vmatpush.xpose.msra.mxu0 0.0
    %1057 = vmatpush.xpose.msra.mxu0 0.0
    %1058 = vmatpush.xpose.msra.mxu0 0.0
    %1059 = vmatpush.xpose.msra.mxu0 0.0
    %1060 = vmatpush.xpose.msra.mxu0 0.0
    %1061 = vmatpush.xpose.msra.mxu0 0.0
    %1062 = vmatpush.xpose.msra.mxu0 0.0
    %1063 = vmatpush.xpose.msra.mxu0 0.0
    %1064 = vmatpush.xpose.msra.mxu0 0.0
    %1065 = vmatpush.xpose.msra.mxu0 %v1048
    %1066 = vmatmul.f32.gmra.mxu0 %v1045
    %v1067 = vpop.f32.mrf.mxu0
    %v1068 = vadd.f32 0.0, %v1067
    %1069 = vdwg.mxu0
    %v1070 = vsel %vm455, %v1068, -inf
    %1071 = vmax.xlane.f32.xlu0 %v1070
    %v1072 = vpop.xlane.xlu0 %1071
    %v1073 = vsub.f32 %v1068, %v1072
    %v1074 = vmul.f32 %v1073, 1.442695
    %v1075 = vpow.pop %v1074
    %v1076 = vsel %vm455, %v1075, 0.0
    %1077 = vadd.xlane.f32.xlu0 %v1076
    %v1078 = vpop.xlane.xlu0 %1077
    %v1079 = vrcp.pop %v1078
    %v1080 = vmul.f32 %v1075, %v1079
    %v1082 = vsel %vm467, %v1080, 0
    %v1085 = vsel %vm471, %v1040, 0
    %1087 = vmatpush.msra.mxu0 0.0
    %1088 = vmatpush.msra.mxu0 0.0
    %1089 = vmatpush.msra.mxu0 0.0
    %1090 = vmatpush.msra.mxu0 0.0
    %1091 = vmatpush.msra.mxu0 0.0
    %1092 = vmatpush.msra.mxu0 0.0
    %1093 = vmatpush.msra.mxu0 0.0
    %1094 = vmatpush.msra.mxu0 0.0
    %1095 = vmatpush.msra.mxu0 0.0
    %1096 = vmatpush.msra.mxu0 0.0
    %1097 = vmatpush.msra.mxu0 0.0
    %1098 = vmatpush.msra.mxu0 0.0
    %1099 = vmatpush.msra.mxu0 0.0
    %1100 = vmatpush.msra.mxu0 0.0
    %1101 = vmatpush.msra.mxu0 0.0
    %1102 = vmatpush.msra.mxu0 %v1085
    %1103 = vmatmul.f32.gmra.mxu0 %v1082
    %v1104 = vpop.f32.mrf.mxu0
    %v1105 = vadd.f32 0.0, %v1104
    %1106 = vdwg.mxu0
    %v1107 = vpack.c.bf16 %v1105, %v1105
    %v1108 = vld [vmem:[%s836 + $0xc] sm:$0xf]
    %v1109 = vld [vmem:[%s836 + $0x1c] sm:$0xf]
    %v1110 = vld [vmem:[%s836 + $0x2c] sm:$0xf]
    %v1111 = vld [vmem:[%s836 + $0x3c] sm:$0xf]
    %v1116 = vunpack.c.l.b16 %v1108
    %v1117 = vunpack.c.l.b16 %v1109
    %v1118 = vunpack.c.l.b16 %v1110
    %v1119 = vunpack.c.l.b16 %v1111
    %v1120 = vpack.c.b16 %v1117, %v1116
    %v1121 = vpack.c.b16 %v1119, %v1118
    %v1125 = vsel %vm429, %v1107, 0
    %1127 = vmatpush.bf16.msra.mxu0 0
    %1128 = vmatpush.bf16.msra.mxu0 0
    %1129 = vmatpush.bf16.msra.mxu0 0
    %1130 = vmatpush.bf16.msra.mxu0 0
    %1131 = vmatpush.bf16.msra.mxu0 0
    %1132 = vmatpush.bf16.msra.mxu0 0
    %1133 = vmatpush.bf16.msra.mxu0 %v1121
    %1134 = vmatpush.bf16.msra.mxu0 %v1120
    %1135 = vmatmul.bf16.gmra.mxu0 %v1125
    %v1136 = vpop.f32.mrf.mxu0
    %v1137 = vadd.f32 0.0, %v1136
    %v1138 = vpop.f32.mrf.mxu0
    %1139 = vdwg.mxu0
    %v1140 = vrot.slane %v834, 3
    %v1142 = vadd.f32 %v1140, %v1137
    %1143 = vrot.lane.b32.xlu0 %v1044, 96
    %v1144 = vpop.permute.xlu0 %1143
    %1145 = vrot.lane.b32.xlu0 %v1027, 96
    %v1146 = vpop.permute.xlu0 %1145
    %v1147 = vsel %vm429, %v1144, 0
    %v1149 = vsel %vm429, %v1146, 0
    %1151 = vmatpush.xpose.msra.mxu0 0.0
    %1152 = vmatpush.xpose.msra.mxu0 0.0
    %1153 = vmatpush.xpose.msra.mxu0 0.0
    %1154 = vmatpush.xpose.msra.mxu0 0.0
    %1155 = vmatpush.xpose.msra.mxu0 0.0
    %1156 = vmatpush.xpose.msra.mxu0 0.0
    %1157 = vmatpush.xpose.msra.mxu0 0.0
    %1158 = vmatpush.xpose.msra.mxu0 0.0
    %1159 = vmatpush.xpose.msra.mxu0 0.0
    %1160 = vmatpush.xpose.msra.mxu0 0.0
    %1161 = vmatpush.xpose.msra.mxu0 0.0
    %1162 = vmatpush.xpose.msra.mxu0 0.0
    %1163 = vmatpush.xpose.msra.mxu0 0.0
    %1164 = vmatpush.xpose.msra.mxu0 0.0
    %1165 = vmatpush.xpose.msra.mxu0 0.0
    %1166 = vmatpush.xpose.msra.mxu0 %v1149
    %1167 = vmatmul.f32.gmra.mxu0 %v1147
    %v1168 = vpop.f32.mrf.mxu0
    %v1169 = vadd.f32 0.0, %v1168
    %1170 = vdwg.mxu0
    %v1171 = vsel %vm455, %v1169, -inf
    %1172 = vmax.xlane.f32.xlu0 %v1171
    %v1173 = vpop.xlane.xlu0 %1172
    %v1174 = vsub.f32 %v1169, %v1173
    %v1175 = vmul.f32 %v1174, 1.442695
    %v1176 = vpow.pop %v1175
    %v1177 = vsel %vm455, %v1176, 0.0
    %1178 = vadd.xlane.f32.xlu0 %v1177
    %v1179 = vpop.xlane.xlu0 %1178
    %v1180 = vrcp.pop %v1179
    %v1181 = vmul.f32 %v1176, %v1180
    %1182 = vrot.lane.b32.xlu0 %v1040, 96
    %v1183 = vpop.permute.xlu0 %1182
    %v1185 = vsel %vm467, %v1181, 0
    %v1187 = vsel %vm471, %v1183, 0
    %1189 = vmatpush.msra.mxu0 0.0
    %1190 = vmatpush.msra.mxu0 0.0
    %1191 = vmatpush.msra.mxu0 0.0
    %1192 = vmatpush.msra.mxu0 0.0
    %1193 = vmatpush.msra.mxu0 0.0
    %1194 = vmatpush.msra.mxu0 0.0
    %1195 = vmatpush.msra.mxu0 0.0
    %1196 = vmatpush.msra.mxu0 0.0
    %1197 = vmatpush.msra.mxu0 0.0
    %1198 = vmatpush.msra.mxu0 0.0
    %1199 = vmatpush.msra.mxu0 0.0
    %1200 = vmatpush.msra.mxu0 0.0
    %1201 = vmatpush.msra.mxu0 0.0
    %1202 = vmatpush.msra.mxu0 0.0
    %1203 = vmatpush.msra.mxu0 0.0
    %1204 = vmatpush.msra.mxu0 %v1187
    %1205 = vmatmul.f32.gmra.mxu0 %v1185
    %v1206 = vpop.f32.mrf.mxu0
    %v1207 = vadd.f32 0.0, %v1206
    %1208 = vdwg.mxu0
    %v1209 = vpack.c.bf16 %v1207, %v1207
    %v1210 = vld [vmem:[%s836 + $0x4c] sm:$0xf]
    %v1211 = vld [vmem:[%s836 + $0x5c] sm:$0xf]
    %v1212 = vld [vmem:[%s836 + $0x6c] sm:$0xf]
    %v1213 = vld [vmem:[%s836 + $0x7c] sm:$0xf]
    %v1218 = vunpack.c.l.b16 %v1210
    %v1219 = vunpack.c.l.b16 %v1211
    %v1220 = vunpack.c.l.b16 %v1212
    %v1221 = vunpack.c.l.b16 %v1213
    %v1222 = vpack.c.b16 %v1219, %v1218
    %v1223 = vpack.c.b16 %v1221, %v1220
    %v1227 = vsel %vm429, %v1209, 0
    %1229 = vmatpush.bf16.msra.mxu0 0
    %1230 = vmatpush.bf16.msra.mxu0 0
    %1231 = vmatpush.bf16.msra.mxu0 0
    %1232 = vmatpush.bf16.msra.mxu0 0
    %1233 = vmatpush.bf16.msra.mxu0 0
    %1234 = vmatpush.bf16.msra.mxu0 0
    %1235 = vmatpush.bf16.msra.mxu0 %v1223
    %1236 = vmatpush.bf16.msra.mxu0 %v1222
    %1237 = vmatmul.bf16.gmra.mxu0 %v1227
    %v1238 = vpop.f32.mrf.mxu0
    %v1239 = vadd.f32 0.0, %v1238
    %v1240 = vpop.f32.mrf.mxu0
    %1241 = vdwg.mxu0
    %v1242 = vadd.f32 %v1142, %v1239
    %1243 = vrot.lane.b32.xlu0 %v1044, 64
    %v1244 = vpop.permute.xlu0 %1243
    %1245 = vrot.lane.b32.xlu0 %v1027, 64
    %v1246 = vpop.permute.xlu0 %1245
    %v1247 = vsel %vm429, %v1244, 0
    %v1249 = vsel %vm429, %v1246, 0
    %1251 = vmatpush.xpose.msra.mxu0 0.0
    %1252 = vmatpush.xpose.msra.mxu0 0.0
    %1253 = vmatpush.xpose.msra.mxu0 0.0
    %1254 = vmatpush.xpose.msra.mxu0 0.0
    %1255 = vmatpush.xpose.msra.mxu0 0.0
    %1256 = vmatpush.xpose.msra.mxu0 0.0
    %1257 = vmatpush.xpose.msra.mxu0 0.0
    %1258 = vmatpush.xpose.msra.mxu0 0.0
    %1259 = vmatpush.xpose.msra.mxu0 0.0
    %1260 = vmatpush.xpose.msra.mxu0 0.0
    %1261 = vmatpush.xpose.msra.mxu0 0.0
    %1262 = vmatpush.xpose.msra.mxu0 0.0
    %1263 = vmatpush.xpose.msra.mxu0 0.0
    %1264 = vmatpush.xpose.msra.mxu0 0.0
    %1265 = vmatpush.xpose.msra.mxu0 0.0
    %1266 = vmatpush.xpose.msra.mxu0 %v1249
    %1267 = vmatmul.f32.gmra.mxu0 %v1247
    %v1268 = vpop.f32.mrf.mxu0
    %v1269 = vadd.f32 0.0, %v1268
    %1270 = vdwg.mxu0
    %v1271 = vsel %vm455, %v1269, -inf
    %1272 = vmax.xlane.f32.xlu0 %v1271
    %v1273 = vpop.xlane.xlu0 %1272
    %v1274 = vsub.f32 %v1269, %v1273
    %v1275 = vmul.f32 %v1274, 1.442695
    %v1276 = vpow.pop %v1275
    %v1277 = vsel %vm455, %v1276, 0.0
    %1278 = vadd.xlane.f32.xlu0 %v1277
    %v1279 = vpop.xlane.xlu0 %1278
    %v1280 = vrcp.pop %v1279
    %v1281 = vmul.f32 %v1276, %v1280
    %1282 = vrot.lane.b32.xlu0 %v1040, 64
    %v1283 = vpop.permute.xlu0 %1282
    %v1285 = vsel %vm467, %v1281, 0
    %v1287 = vsel %vm471, %v1283, 0
    %1289 = vmatpush.msra.mxu0 0.0
    %1290 = vmatpush.msra.mxu0 0.0
    %1291 = vmatpush.msra.mxu0 0.0
    %1292 = vmatpush.msra.mxu0 0.0
    %1293 = vmatpush.msra.mxu0 0.0
    %1294 = vmatpush.msra.mxu0 0.0
    %1295 = vmatpush.msra.mxu0 0.0
    %1296 = vmatpush.msra.mxu0 0.0
    %1297 = vmatpush.msra.mxu0 0.0
    %1298 = vmatpush.msra.mxu0 0.0
    %1299 = vmatpush.msra.mxu0 0.0
    %1300 = vmatpush.msra.mxu0 0.0
    %1301 = vmatpush.msra.mxu0 0.0
    %1302 = vmatpush.msra.mxu0 0.0
    %1303 = vmatpush.msra.mxu0 0.0
    %1304 = vmatpush.msra.mxu0 %v1287
    %1305 = vmatmul.f32.gmra.mxu0 %v1285
    %v1306 = vpop.f32.mrf.mxu0
    %v1307 = vadd.f32 0.0, %v1306
    %1308 = vdwg.mxu0
    %v1309 = vpack.c.bf16 %v1307, %v1307
    %v1310 = vld [vmem:[%s836 + $0x8c] sm:$0xf]
    %v1311 = vld [vmem:[%s836 + $0x9c] sm:$0xf]
    %v1312 = vld [vmem:[%s836 + $0xac] sm:$0xf]
    %v1313 = vld [vmem:[%s836 + $0xbc] sm:$0xf]
    %v1318 = vunpack.c.l.b16 %v1310
    %v1319 = vunpack.c.l.b16 %v1311
    %v1320 = vunpack.c.l.b16 %v1312
    %v1321 = vunpack.c.l.b16 %v1313
    %v1322 = vpack.c.b16 %v1319, %v1318
    %v1323 = vpack.c.b16 %v1321, %v1320
    %v1327 = vsel %vm429, %v1309, 0
    %1329 = vmatpush.bf16.msra.mxu0 0
    %1330 = vmatpush.bf16.msra.mxu0 0
    %1331 = vmatpush.bf16.msra.mxu0 0
    %1332 = vmatpush.bf16.msra.mxu0 0
    %1333 = vmatpush.bf16.msra.mxu0 0
    %1334 = vmatpush.bf16.msra.mxu0 0
    %1335 = vmatpush.bf16.msra.mxu0 %v1323
    %1336 = vmatpush.bf16.msra.mxu0 %v1322
    %1337 = vmatmul.bf16.gmra.mxu0 %v1327
    %v1338 = vpop.f32.mrf.mxu0
    %v1339 = vadd.f32 0.0, %v1338
    %v1340 = vpop.f32.mrf.mxu0
    %1341 = vdwg.mxu0
    %v1342 = vadd.f32 %v1242, %v1339
    %1343 = vrot.lane.b32.xlu0 %v1044, 32
    %v1344 = vpop.permute.xlu0 %1343
    %1345 = vrot.lane.b32.xlu0 %v1027, 32
    %v1346 = vpop.permute.xlu0 %1345
    %v1347 = vsel %vm429, %v1344, 0
    %v1349 = vsel %vm429, %v1346, 0
    %1351 = vmatpush.xpose.msra.mxu0 0.0
    %1352 = vmatpush.xpose.msra.mxu0 0.0
    %1353 = vmatpush.xpose.msra.mxu0 0.0
    %1354 = vmatpush.xpose.msra.mxu0 0.0
    %1355 = vmatpush.xpose.msra.mxu0 0.0
    %1356 = vmatpush.xpose.msra.mxu0 0.0
    %1357 = vmatpush.xpose.msra.mxu0 0.0
    %1358 = vmatpush.xpose.msra.mxu0 0.0
    %1359 = vmatpush.xpose.msra.mxu0 0.0
    %1360 = vmatpush.xpose.msra.mxu0 0.0
    %1361 = vmatpush.xpose.msra.mxu0 0.0
    %1362 = vmatpush.xpose.msra.mxu0 0.0
    %1363 = vmatpush.xpose.msra.mxu0 0.0
    %1364 = vmatpush.xpose.msra.mxu0 0.0
    %1365 = vmatpush.xpose.msra.mxu0 0.0
    %1366 = vmatpush.xpose.msra.mxu0 %v1349
    %1367 = vmatmul.f32.gmra.mxu0 %v1347
    %v1368 = vpop.f32.mrf.mxu0
    %v1369 = vadd.f32 0.0, %v1368
    %1370 = vdwg.mxu0
    %v1371 = vsel %vm455, %v1369, -inf
    %1372 = vmax.xlane.f32.xlu0 %v1371
    %v1373 = vpop.xlane.xlu0 %1372
    %v1374 = vsub.f32 %v1369, %v1373
    %v1375 = vmul.f32 %v1374, 1.442695
    %v1376 = vpow.pop %v1375
    %v1377 = vsel %vm455, %v1376, 0.0
    %1378 = vadd.xlane.f32.xlu0 %v1377
    %v1379 = vpop.xlane.xlu0 %1378
    %v1380 = vrcp.pop %v1379
    %v1381 = vmul.f32 %v1376, %v1380
    %1382 = vrot.lane.b32.xlu0 %v1040, 32
    %v1383 = vpop.permute.xlu0 %1382
    %v1385 = vsel %vm467, %v1381, 0
    %v1387 = vsel %vm471, %v1383, 0
    %1389 = vmatpush.msra.mxu0 0.0
    %1390 = vmatpush.msra.mxu0 0.0
    %1391 = vmatpush.msra.mxu0 0.0
    %1392 = vmatpush.msra.mxu0 0.0
    %1393 = vmatpush.msra.mxu0 0.0
    %1394 = vmatpush.msra.mxu0 0.0
    %1395 = vmatpush.msra.mxu0 0.0
    %1396 = vmatpush.msra.mxu0 0.0
    %1397 = vmatpush.msra.mxu0 0.0
    %1398 = vmatpush.msra.mxu0 0.0
    %1399 = vmatpush.msra.mxu0 0.0
    %1400 = vmatpush.msra.mxu0 0.0
    %1401 = vmatpush.msra.mxu0 0.0
    %1402 = vmatpush.msra.mxu0 0.0
    %1403 = vmatpush.msra.mxu0 0.0
    %1404 = vmatpush.msra.mxu0 %v1387
    %1405 = vmatmul.f32.gmra.mxu0 %v1385
    %v1406 = vpop.f32.mrf.mxu0
    %v1407 = vadd.f32 0.0, %v1406
    %1408 = vdwg.mxu0
    %v1409 = vpack.c.bf16 %v1407, %v1407
    %v1410 = vld [vmem:[%s836 + $0xcc] sm:$0xf]
    %v1411 = vld [vmem:[%s836 + $0xdc] sm:$0xf]
    %v1412 = vld [vmem:[%s836 + $0xec] sm:$0xf]
    %v1413 = vld [vmem:[%s836 + $0xfc] sm:$0xf]
    %v1418 = vunpack.c.l.b16 %v1410
    %v1419 = vunpack.c.l.b16 %v1411
    %v1420 = vunpack.c.l.b16 %v1412
    %v1421 = vunpack.c.l.b16 %v1413
    %v1422 = vpack.c.b16 %v1419, %v1418
    %v1423 = vpack.c.b16 %v1421, %v1420
    %v1427 = vsel %vm429, %v1409, 0
    %1429 = vmatpush.bf16.msra.mxu0 0
    %1430 = vmatpush.bf16.msra.mxu0 0
    %1431 = vmatpush.bf16.msra.mxu0 0
    %1432 = vmatpush.bf16.msra.mxu0 0
    %1433 = vmatpush.bf16.msra.mxu0 0
    %1434 = vmatpush.bf16.msra.mxu0 0
    %1435 = vmatpush.bf16.msra.mxu0 %v1423
    %1436 = vmatpush.bf16.msra.mxu0 %v1422
    %1437 = vmatmul.bf16.gmra.mxu0 %v1427
    %v1438 = vpop.f32.mrf.mxu0
    %v1439 = vadd.f32 0.0, %v1438
    %v1440 = vpop.f32.mrf.mxu0
    %1441 = vdwg.mxu0
    %v1442 = vadd.f32 %v1342, %v1439
    %v1443 = vmax.f32 %v1442, 0.0
    %v1444 = vpack.c.bf16 %v1443, %v1443
    %s1445 = scalar_lea.vmem [#allocation10], 10
    %v1446 = vld [vmem:[%s1445] sm:$0x1f]
    %v1447 = vpack.c.bf16 %v210, %v210
    %s1448 = scalar_lea.vmem [#allocation9], 512
    %v1449 = vld [vmem:[%s1448] sm:$0xff]
    %v1450 = vld [vmem:[%s1448 + $0x8] sm:$0xf]
    %v1451 = vld [vmem:[%s1448 + $0x10] sm:$0xff]
    %v1452 = vld [vmem:[%s1448 + $0x18] sm:$0xf]
    %v1453 = vld [vmem:[%s1448 + $0x20] sm:$0xff]
    %v1454 = vld [vmem:[%s1448 + $0x28] sm:$0xf]
    %v1455 = vld [vmem:[%s1448 + $0x30] sm:$0xff]
    %v1456 = vld [vmem:[%s1448 + $0x38] sm:$0xf]
    %v1457 = vld [vmem:[%s1448 + $0x40] sm:$0xff]
    %v1458 = vld [vmem:[%s1448 + $0x48] sm:$0xf]
    %v1459 = vld [vmem:[%s1448 + $0x50] sm:$0xff]
    %v1460 = vld [vmem:[%s1448 + $0x58] sm:$0xf]
    %v1461 = vld [vmem:[%s1448 + $0x60] sm:$0xff]
    %v1462 = vld [vmem:[%s1448 + $0x68] sm:$0xf]
    %v1463 = vld [vmem:[%s1448 + $0x70] sm:$0xff]
    %v1464 = vld [vmem:[%s1448 + $0x78] sm:$0xf]
    %v1465 = vld [vmem:[%s1448 + $0x80] sm:$0xff]
    %v1466 = vld [vmem:[%s1448 + $0x88] sm:$0xf]
    %v1467 = vld [vmem:[%s1448 + $0x90] sm:$0xff]
    %v1468 = vld [vmem:[%s1448 + $0x98] sm:$0xf]
    %v1469 = vld [vmem:[%s1448 + $0xa0] sm:$0xff]
    %v1470 = vld [vmem:[%s1448 + $0xa8] sm:$0xf]
    %v1471 = vld [vmem:[%s1448 + $0xb0] sm:$0xff]
    %v1472 = vld [vmem:[%s1448 + $0xb8] sm:$0xf]
    %v1473 = vld [vmem:[%s1448 + $0xc0] sm:$0xff]
    %v1474 = vld [vmem:[%s1448 + $0xc8] sm:$0xf]
    %v1475 = vld [vmem:[%s1448 + $0xd0] sm:$0xff]
    %v1476 = vld [vmem:[%s1448 + $0xd8] sm:$0xf]
    %v1477 = vld [vmem:[%s1448 + $0xe0] sm:$0xff]
    %v1478 = vld [vmem:[%s1448 + $0xe8] sm:$0xf]
    %v1479 = vld [vmem:[%s1448 + $0xf0] sm:$0xff]
    %v1480 = vld [vmem:[%s1448 + $0xf8] sm:$0xf]
    %v1513 = vunpack.c.l.b16 %v1449
    %v1514 = vunpack.c.h.b16 %v1449
    %v1515 = vunpack.c.l.b16 %v1450
    %v1516 = vunpack.c.l.b16 %v1451
    %v1517 = vunpack.c.h.b16 %v1451
    %v1518 = vunpack.c.l.b16 %v1452
    %v1519 = vunpack.c.l.b16 %v1453
    %v1520 = vunpack.c.h.b16 %v1453
    %v1521 = vunpack.c.l.b16 %v1454
    %v1522 = vunpack.c.l.b16 %v1455
    %v1523 = vunpack.c.h.b16 %v1455
    %v1524 = vunpack.c.l.b16 %v1456
    %v1525 = vunpack.c.l.b16 %v1457
    %v1526 = vunpack.c.h.b16 %v1457
    %v1527 = vunpack.c.l.b16 %v1458
    %v1528 = vunpack.c.l.b16 %v1459
    %v1529 = vunpack.c.h.b16 %v1459
    %v1530 = vunpack.c.l.b16 %v1460
    %v1531 = vunpack.c.l.b16 %v1461
    %v1532 = vunpack.c.h.b16 %v1461
    %v1533 = vunpack.c.l.b16 %v1462
    %v1534 = vunpack.c.l.b16 %v1463
    %v1535 = vunpack.c.h.b16 %v1463
    %v1536 = vunpack.c.l.b16 %v1464
    %v1537 = vunpack.c.l.b16 %v1465
    %v1538 = vunpack.c.h.b16 %v1465
    %v1539 = vunpack.c.l.b16 %v1466
    %v1540 = vunpack.c.l.b16 %v1467
    %v1541 = vunpack.c.h.b16 %v1467
    %v1542 = vunpack.c.l.b16 %v1468
    %v1543 = vunpack.c.l.b16 %v1469
    %v1544 = vunpack.c.h.b16 %v1469
    %v1545 = vunpack.c.l.b16 %v1470
    %v1546 = vunpack.c.l.b16 %v1471
    %v1547 = vunpack.c.h.b16 %v1471
    %v1548 = vunpack.c.l.b16 %v1472
    %v1549 = vunpack.c.l.b16 %v1473
    %v1550 = vunpack.c.h.b16 %v1473
    %v1551 = vunpack.c.l.b16 %v1474
    %v1552 = vunpack.c.l.b16 %v1475
    %v1553 = vunpack.c.h.b16 %v1475
    %v1554 = vunpack.c.l.b16 %v1476
    %v1555 = vunpack.c.l.b16 %v1477
    %v1556 = vunpack.c.h.b16 %v1477
    %v1557 = vunpack.c.l.b16 %v1478
    %v1558 = vunpack.c.l.b16 %v1479
    %v1559 = vunpack.c.h.b16 %v1479
    %v1560 = vunpack.c.l.b16 %v1480
    %v1561 = vpack.c.b16 %v1516, %v1513
    %v1562 = vpack.c.b16 %v1517, %v1514
    %v1563 = vpack.c.b16 %v1518, %v1515
    %v1564 = vpack.c.b16 %v1522, %v1519
    %v1565 = vpack.c.b16 %v1523, %v1520
    %v1566 = vpack.c.b16 %v1524, %v1521
    %v1567 = vpack.c.b16 %v1528, %v1525
    %v1568 = vpack.c.b16 %v1529, %v1526
    %v1569 = vpack.c.b16 %v1530, %v1527
    %v1570 = vpack.c.b16 %v1534, %v1531
    %v1571 = vpack.c.b16 %v1535, %v1532
    %v1572 = vpack.c.b16 %v1536, %v1533
    %v1573 = vpack.c.b16 %v1540, %v1537
    %v1574 = vpack.c.b16 %v1541, %v1538
    %v1575 = vpack.c.b16 %v1542, %v1539
    %v1576 = vpack.c.b16 %v1546, %v1543
    %v1577 = vpack.c.b16 %v1547, %v1544
    %v1578 = vpack.c.b16 %v1548, %v1545
    %v1579 = vpack.c.b16 %v1552, %v1549
    %v1580 = vpack.c.b16 %v1553, %v1550
    %v1581 = vpack.c.b16 %v1554, %v1551
    %v1582 = vpack.c.b16 %v1558, %v1555
    %v1583 = vpack.c.b16 %v1559, %v1556
    %v1584 = vpack.c.b16 %v1560, %v1557
    %v1610 = vperm.slane %v1446, 0
    %v1611 = vperm.slane %v1446, 1
    %v1612 = vperm.slane %v1446, 2
    %1616 = vmatpush.bf16.msra.mxu0 %v1582
    %1617 = vmatpush.bf16.msra.mxu0 %v1579
    %1618 = vmatpush.bf16.msra.mxu0 %v1576
    %1619 = vmatpush.bf16.msra.mxu0 %v1573
    %1620 = vmatpush.bf16.msra.mxu0 %v1570
    %1621 = vmatpush.bf16.msra.mxu0 %v1567
    %1622 = vmatpush.bf16.msra.mxu0 %v1564
    %1623 = vmatpush.bf16.msra.mxu0 %v1561
    %1624 = vmatmul.bf16.gmra.mxu0 %v1447
    %v1625 = vpop.f32.mrf.mxu0
    %v1626 = vadd.f32 %v1610, %v1625
    %v1627 = vpop.f32.mrf.mxu0
    %1628 = vdwg.mxu0
    %1629 = vmatpush.bf16.msra.mxu0 %v1583
    %1630 = vmatpush.bf16.msra.mxu0 %v1580
    %1631 = vmatpush.bf16.msra.mxu0 %v1577
    %1632 = vmatpush.bf16.msra.mxu0 %v1574
    %1633 = vmatpush.bf16.msra.mxu0 %v1571
    %1634 = vmatpush.bf16.msra.mxu0 %v1568
    %1635 = vmatpush.bf16.msra.mxu0 %v1565
    %1636 = vmatpush.bf16.msra.mxu0 %v1562
    %1637 = vmatmul.bf16.gmra.mxu0 %v1447
    %v1638 = vpop.f32.mrf.mxu0
    %v1639 = vadd.f32 %v1611, %v1638
    %v1640 = vpop.f32.mrf.mxu0
    %1641 = vdwg.mxu0
    %1642 = vmatpush.bf16.msra.mxu0 %v1584
    %1643 = vmatpush.bf16.msra.mxu0 %v1581
    %1644 = vmatpush.bf16.msra.mxu0 %v1578
    %1645 = vmatpush.bf16.msra.mxu0 %v1575
    %1646 = vmatpush.bf16.msra.mxu0 %v1572
    %1647 = vmatpush.bf16.msra.mxu0 %v1569
    %1648 = vmatpush.bf16.msra.mxu0 %v1566
    %1649 = vmatpush.bf16.msra.mxu0 %v1563
    %1650 = vmatmul.bf16.gmra.mxu0 %v1447
    %v1651 = vpop.f32.mrf.mxu0
    %v1652 = vadd.f32 %v1612, %v1651
    %v1653 = vpop.f32.mrf.mxu0
    %1654 = vdwg.mxu0
    %v1655 = vmul.f32 %v1626, %v1639
    %vm1656 = vcmask 253952
    %v1657 = vsel %vm1656, %v1655, 0.0
    %1658 = vadd.xlane.f32.xlu0 %v1657
    %v1659 = vpop.xlane.xlu0 %1658
    %v1660 = vsub.f32 %v1659, %v1659
    %v1661 = vmul.f32 %v1660, 1.442695
    %v1662 = vpow.pop %v1661
    %v1663 = vadd.f32 %v1662, 0.0
    %v1664 = vrcp.pop %v1663
    %v1665 = vmul.f32 %v1662, %v1664
    %vm1666 = vcmask 7168
    %v1668 = vsel %vm1666, %v1665, 0
    %vm1670 = vcmask 1040384
    %v1672 = vsel %vm1670, %v1652, 0
    %1674 = vmatpush.msra.mxu0 0.0
    %1675 = vmatpush.msra.mxu0 0.0
    %1676 = vmatpush.msra.mxu0 0.0
    %1677 = vmatpush.msra.mxu0 0.0
    %1678 = vmatpush.msra.mxu0 0.0
    %1679 = vmatpush.msra.mxu0 0.0
    %1680 = vmatpush.msra.mxu0 0.0
    %1681 = vmatpush.msra.mxu0 0.0
    %1682 = vmatpush.msra.mxu0 0.0
    %1683 = vmatpush.msra.mxu0 0.0
    %1684 = vmatpush.msra.mxu0 0.0
    %1685 = vmatpush.msra.mxu0 0.0
    %1686 = vmatpush.msra.mxu0 0.0
    %1687 = vmatpush.msra.mxu0 0.0
    %1688 = vmatpush.msra.mxu0 0.0
    %1689 = vmatpush.msra.mxu0 %v1672
    %1690 = vmatmul.f32.gmra.mxu0 %v1668
    %v1691 = vpop.f32.mrf.mxu0
    %v1692 = vadd.f32 0.0, %v1691
    %1693 = vdwg.mxu0
    %v1694 = vpack.c.bf16 %v1692, %v1692
    %v1695 = vld [vmem:[%s1448 + $0xc] sm:$0xf]
    %v1696 = vld [vmem:[%s1448 + $0x1c] sm:$0xf]
    %v1697 = vld [vmem:[%s1448 + $0x2c] sm:$0xf]
    %v1698 = vld [vmem:[%s1448 + $0x3c] sm:$0xf]
    %v1703 = vunpack.c.l.b16 %v1695
    %v1704 = vunpack.c.l.b16 %v1696
    %v1705 = vunpack.c.l.b16 %v1697
    %v1706 = vunpack.c.l.b16 %v1698
    %v1707 = vpack.c.b16 %v1704, %v1703
    %v1708 = vpack.c.b16 %v1706, %v1705
    %v1712 = vsel %vm429, %v1694, 0
    %1714 = vmatpush.bf16.msra.mxu0 0
    %1715 = vmatpush.bf16.msra.mxu0 0
    %1716 = vmatpush.bf16.msra.mxu0 0
    %1717 = vmatpush.bf16.msra.mxu0 0
    %1718 = vmatpush.bf16.msra.mxu0 0
    %1719 = vmatpush.bf16.msra.mxu0 0
    %1720 = vmatpush.bf16.msra.mxu0 %v1708
    %1721 = vmatpush.bf16.msra.mxu0 %v1707
    %1722 = vmatmul.bf16.gmra.mxu0 %v1712
    %v1723 = vpop.f32.mrf.mxu0
    %v1724 = vadd.f32 0.0, %v1723
    %v1725 = vpop.f32.mrf.mxu0
    %1726 = vdwg.mxu0
    %v1727 = vrot.slane %v1446, 3
    %v1729 = vadd.f32 %v1727, %v1724
    %1731 = vrot.lane.b32.xlu0 %v1655, 96
    %v1732 = vpop.permute.xlu0 %1731
    %v1734 = vsel %vm1656, %v1732, 0.0
    %1735 = vadd.xlane.f32.xlu0 %v1734
    %v1736 = vpop.xlane.xlu0 %1735
    %v1737 = vsub.f32 %v1736, %v1736
    %v1738 = vmul.f32 %v1737, 1.442695
    %v1739 = vpow.pop %v1738
    %v1740 = vadd.f32 %v1739, 0.0
    %v1741 = vrcp.pop %v1740
    %v1742 = vmul.f32 %v1739, %v1741
    %1743 = vrot.lane.b32.xlu0 %v1652, 96
    %v1744 = vpop.permute.xlu0 %1743
    %v1746 = vsel %vm1666, %v1742, 0
    %v1748 = vsel %vm1670, %v1744, 0
    %1750 = vmatpush.msra.mxu0 0.0
    %1751 = vmatpush.msra.mxu0 0.0
    %1752 = vmatpush.msra.mxu0 0.0
    %1753 = vmatpush.msra.mxu0 0.0
    %1754 = vmatpush.msra.mxu0 0.0
    %1755 = vmatpush.msra.mxu0 0.0
    %1756 = vmatpush.msra.mxu0 0.0
    %1757 = vmatpush.msra.mxu0 0.0
    %1758 = vmatpush.msra.mxu0 0.0
    %1759 = vmatpush.msra.mxu0 0.0
    %1760 = vmatpush.msra.mxu0 0.0
    %1761 = vmatpush.msra.mxu0 0.0
    %1762 = vmatpush.msra.mxu0 0.0
    %1763 = vmatpush.msra.mxu0 0.0
    %1764 = vmatpush.msra.mxu0 0.0
    %1765 = vmatpush.msra.mxu0 %v1748
    %1766 = vmatmul.f32.gmra.mxu0 %v1746
    %v1767 = vpop.f32.mrf.mxu0
    %v1768 = vadd.f32 0.0, %v1767
    %1769 = vdwg.mxu0
    %v1770 = vpack.c.bf16 %v1768, %v1768
    %v1771 = vld [vmem:[%s1448 + $0x4c] sm:$0xf]
    %v1772 = vld [vmem:[%s1448 + $0x5c] sm:$0xf]
    %v1773 = vld [vmem:[%s1448 + $0x6c] sm:$0xf]
    %v1774 = vld [vmem:[%s1448 + $0x7c] sm:$0xf]
    %v1779 = vunpack.c.l.b16 %v1771
    %v1780 = vunpack.c.l.b16 %v1772
    %v1781 = vunpack.c.l.b16 %v1773
    %v1782 = vunpack.c.l.b16 %v1774
    %v1783 = vpack.c.b16 %v1780, %v1779
    %v1784 = vpack.c.b16 %v1782, %v1781
    %v1788 = vsel %vm429, %v1770, 0
    %1790 = vmatpush.bf16.msra.mxu0 0
    %1791 = vmatpush.bf16.msra.mxu0 0
    %1792 = vmatpush.bf16.msra.mxu0 0
    %1793 = vmatpush.bf16.msra.mxu0 0
    %1794 = vmatpush.bf16.msra.mxu0 0
    %1795 = vmatpush.bf16.msra.mxu0 0
    %1796 = vmatpush.bf16.msra.mxu0 %v1784
    %1797 = vmatpush.bf16.msra.mxu0 %v1783
    %1798 = vmatmul.bf16.gmra.mxu0 %v1788
    %v1799 = vpop.f32.mrf.mxu0
    %v1800 = vadd.f32 0.0, %v1799
    %v1801 = vpop.f32.mrf.mxu0
    %1802 = vdwg.mxu0
    %v1803 = vadd.f32 %v1729, %v1800
    %1804 = vrot.lane.b32.xlu0 %v1655, 64
    %v1805 = vpop.permute.xlu0 %1804
    %v1807 = vsel %vm1656, %v1805, 0.0
    %1808 = vadd.xlane.f32.xlu0 %v1807
    %v1809 = vpop.xlane.xlu0 %1808
    %v1810 = vsub.f32 %v1809, %v1809
    %v1811 = vmul.f32 %v1810, 1.442695
    %v1812 = vpow.pop %v1811
    %v1813 = vadd.f32 %v1812, 0.0
    %v1814 = vrcp.pop %v1813
    %v1815 = vmul.f32 %v1812, %v1814
    %1816 = vrot.lane.b32.xlu0 %v1652, 64
    %v1817 = vpop.permute.xlu0 %1816
    %v1819 = vsel %vm1666, %v1815, 0
    %v1821 = vsel %vm1670, %v1817, 0
    %1823 = vmatpush.msra.mxu0 0.0
    %1824 = vmatpush.msra.mxu0 0.0
    %1825 = vmatpush.msra.mxu0 0.0
    %1826 = vmatpush.msra.mxu0 0.0
    %1827 = vmatpush.msra.mxu0 0.0
    %1828 = vmatpush.msra.mxu0 0.0
    %1829 = vmatpush.msra.mxu0 0.0
    %1830 = vmatpush.msra.mxu0 0.0
    %1831 = vmatpush.msra.mxu0 0.0
    %1832 = vmatpush.msra.mxu0 0.0
    %1833 = vmatpush.msra.mxu0 0.0
    %1834 = vmatpush.msra.mxu0 0.0
    %1835 = vmatpush.msra.mxu0 0.0
    %1836 = vmatpush.msra.mxu0 0.0
    %1837 = vmatpush.msra.mxu0 0.0
    %1838 = vmatpush.msra.mxu0 %v1821
    %1839 = vmatmul.f32.gmra.mxu0 %v1819
    %v1840 = vpop.f32.mrf.mxu0
    %v1841 = vadd.f32 0.0, %v1840
    %1842 = vdwg.mxu0
    %v1843 = vpack.c.bf16 %v1841, %v1841
    %v1844 = vld [vmem:[%s1448 + $0x8c] sm:$0xf]
    %v1845 = vld [vmem:[%s1448 + $0x9c] sm:$0xf]
    %v1846 = vld [vmem:[%s1448 + $0xac] sm:$0xf]
    %v1847 = vld [vmem:[%s1448 + $0xbc] sm:$0xf]
    %v1852 = vunpack.c.l.b16 %v1844
    %v1853 = vunpack.c.l.b16 %v1845
    %v1854 = vunpack.c.l.b16 %v1846
    %v1855 = vunpack.c.l.b16 %v1847
    %v1856 = vpack.c.b16 %v1853, %v1852
    %v1857 = vpack.c.b16 %v1855, %v1854
    %v1861 = vsel %vm429, %v1843, 0
    %1863 = vmatpush.bf16.msra.mxu0 0
    %1864 = vmatpush.bf16.msra.mxu0 0
    %1865 = vmatpush.bf16.msra.mxu0 0
    %1866 = vmatpush.bf16.msra.mxu0 0
    %1867 = vmatpush.bf16.msra.mxu0 0
    %1868 = vmatpush.bf16.msra.mxu0 0
    %1869 = vmatpush.bf16.msra.mxu0 %v1857
    %1870 = vmatpush.bf16.msra.mxu0 %v1856
    %1871 = vmatmul.bf16.gmra.mxu0 %v1861
    %v1872 = vpop.f32.mrf.mxu0
    %v1873 = vadd.f32 0.0, %v1872
    %v1874 = vpop.f32.mrf.mxu0
    %1875 = vdwg.mxu0
    %v1876 = vadd.f32 %v1803, %v1873
    %1877 = vrot.lane.b32.xlu0 %v1655, 32
    %v1878 = vpop.permute.xlu0 %1877
    %v1880 = vsel %vm1656, %v1878, 0.0
    %1881 = vadd.xlane.f32.xlu0 %v1880
    %v1882 = vpop.xlane.xlu0 %1881
    %v1883 = vsub.f32 %v1882, %v1882
    %v1884 = vmul.f32 %v1883, 1.442695
    %v1885 = vpow.pop %v1884
    %v1886 = vadd.f32 %v1885, 0.0
    %v1887 = vrcp.pop %v1886
    %v1888 = vmul.f32 %v1885, %v1887
    %1889 = vrot.lane.b32.xlu0 %v1652, 32
    %v1890 = vpop.permute.xlu0 %1889
    %v1892 = vsel %vm1666, %v1888, 0
    %v1894 = vsel %vm1670, %v1890, 0
    %1896 = vmatpush.msra.mxu0 0.0
    %1897 = vmatpush.msra.mxu0 0.0
    %1898 = vmatpush.msra.mxu0 0.0
    %1899 = vmatpush.msra.mxu0 0.0
    %1900 = vmatpush.msra.mxu0 0.0
    %1901 = vmatpush.msra.mxu0 0.0
    %1902 = vmatpush.msra.mxu0 0.0
    %1903 = vmatpush.msra.mxu0 0.0
    %1904 = vmatpush.msra.mxu0 0.0
    %1905 = vmatpush.msra.mxu0 0.0
    %1906 = vmatpush.msra.mxu0 0.0
    %1907 = vmatpush.msra.mxu0 0.0
    %1908 = vmatpush.msra.mxu0 0.0
    %1909 = vmatpush.msra.mxu0 0.0
    %1910 = vmatpush.msra.mxu0 0.0
    %1911 = vmatpush.msra.mxu0 %v1894
    %1912 = vmatmul.f32.gmra.mxu0 %v1892
    %v1913 = vpop.f32.mrf.mxu0
    %v1914 = vadd.f32 0.0, %v1913
    %1915 = vdwg.mxu0
    %v1916 = vpack.c.bf16 %v1914, %v1914
    %v1917 = vld [vmem:[%s1448 + $0xcc] sm:$0xf]
    %v1918 = vld [vmem:[%s1448 + $0xdc] sm:$0xf]
    %v1919 = vld [vmem:[%s1448 + $0xec] sm:$0xf]
    %v1920 = vld [vmem:[%s1448 + $0xfc] sm:$0xf]
    %v1925 = vunpack.c.l.b16 %v1917
    %v1926 = vunpack.c.l.b16 %v1918
    %v1927 = vunpack.c.l.b16 %v1919
    %v1928 = vunpack.c.l.b16 %v1920
    %v1929 = vpack.c.b16 %v1926, %v1925
    %v1930 = vpack.c.b16 %v1928, %v1927
    %v1934 = vsel %vm429, %v1916, 0
    %1936 = vmatpush.bf16.msra.mxu0 0
    %1937 = vmatpush.bf16.msra.mxu0 0
    %1938 = vmatpush.bf16.msra.mxu0 0
    %1939 = vmatpush.bf16.msra.mxu0 0
    %1940 = vmatpush.bf16.msra.mxu0 0
    %1941 = vmatpush.bf16.msra.mxu0 0
    %1942 = vmatpush.bf16.msra.mxu0 %v1930
    %1943 = vmatpush.bf16.msra.mxu0 %v1929
    %1944 = vmatmul.bf16.gmra.mxu0 %v1934
    %v1945 = vpop.f32.mrf.mxu0
    %v1946 = vadd.f32 0.0, %v1945
    %v1947 = vpop.f32.mrf.mxu0
    %1948 = vdwg.mxu0
    %v1949 = vadd.f32 %v1876, %v1946
    %v1950 = vmax.f32 %v1949, 0.0
    %v1951 = vpack.c.bf16 %v1950, %v1950
    %s1952 = smul.u32 4, 64
    %s1953 = smul.u32 %s1952, 1
    %s1954 = sshll.u32 %s1953, 4
    %1955 = dma.done [#allocation3], %s1954
    %v1956 = vld [vmem:[#allocation2] sm:$0xf]
    %v1957 = vld [vmem:[#allocation2 + $0x4] sm:$0xf]
    %v1958 = vld [vmem:[#allocation2 + $0x8] sm:$0xf]
    %v1959 = vld [vmem:[#allocation2 + $0xc] sm:$0xf]
    %v1960 = vld [vmem:[#allocation2 + $0x10] sm:$0xf]
    %v1961 = vld [vmem:[#allocation2 + $0x14] sm:$0xf]
    %v1962 = vld [vmem:[#allocation2 + $0x18] sm:$0xf]
    %v1963 = vld [vmem:[#allocation2 + $0x1c] sm:$0xf]
    %v1964 = vld [vmem:[#allocation2 + $0x20] sm:$0xf]
    %v1965 = vld [vmem:[#allocation2 + $0x24] sm:$0xf]
    %v1966 = vld [vmem:[#allocation2 + $0x28] sm:$0xf]
    %v1967 = vld [vmem:[#allocation2 + $0x2c] sm:$0xf]
    %v1968 = vld [vmem:[#allocation2 + $0x30] sm:$0xf]
    %v1969 = vld [vmem:[#allocation2 + $0x34] sm:$0xf]
    %v1970 = vld [vmem:[#allocation2 + $0x38] sm:$0xf]
    %v1971 = vld [vmem:[#allocation2 + $0x3c] sm:$0xf]
    %v1972 = vld [vmem:[#allocation2 + $0x40] sm:$0xf]
    %v1973 = vld [vmem:[#allocation2 + $0x44] sm:$0xf]
    %v1974 = vld [vmem:[#allocation2 + $0x48] sm:$0xf]
    %v1975 = vld [vmem:[#allocation2 + $0x4c] sm:$0xf]
    %v1976 = vld [vmem:[#allocation2 + $0x50] sm:$0xf]
    %v1977 = vld [vmem:[#allocation2 + $0x54] sm:$0xf]
    %v1978 = vld [vmem:[#allocation2 + $0x58] sm:$0xf]
    %v1979 = vld [vmem:[#allocation2 + $0x5c] sm:$0xf]
    %v1980 = vld [vmem:[#allocation2 + $0x60] sm:$0xf]
    %v1981 = vld [vmem:[#allocation2 + $0x64] sm:$0xf]
    %v1982 = vld [vmem:[#allocation2 + $0x68] sm:$0xf]
    %v1983 = vld [vmem:[#allocation2 + $0x6c] sm:$0xf]
    %v1984 = vld [vmem:[#allocation2 + $0x70] sm:$0xf]
    %v1985 = vld [vmem:[#allocation2 + $0x74] sm:$0xf]
    %v1986 = vld [vmem:[#allocation2 + $0x78] sm:$0xf]
    %v1987 = vld [vmem:[#allocation2 + $0x7c] sm:$0xf]
    %v2004 = vunpack.c.l.b16 %v1972
    %v2005 = vunpack.c.l.b16 %v1973
    %v2006 = vunpack.c.l.b16 %v1974
    %v2007 = vunpack.c.l.b16 %v1975
    %v2008 = vunpack.c.l.b16 %v1976
    %v2009 = vunpack.c.l.b16 %v1977
    %v2010 = vunpack.c.l.b16 %v1978
    %v2011 = vunpack.c.l.b16 %v1979
    %v2012 = vunpack.c.l.b16 %v1980
    %v2013 = vunpack.c.l.b16 %v1981
    %v2014 = vunpack.c.l.b16 %v1982
    %v2015 = vunpack.c.l.b16 %v1983
    %v2016 = vunpack.c.l.b16 %v1984
    %v2017 = vunpack.c.l.b16 %v1985
    %v2018 = vunpack.c.l.b16 %v1986
    %v2019 = vunpack.c.l.b16 %v1987
    %v2020 = vpack.c.b16 %v2005, %v2004
    %v2021 = vpack.c.b16 %v2007, %v2006
    %v2022 = vpack.c.b16 %v2009, %v2008
    %v2023 = vpack.c.b16 %v2011, %v2010
    %v2024 = vpack.c.b16 %v2013, %v2012
    %v2025 = vpack.c.b16 %v2015, %v2014
    %v2026 = vpack.c.b16 %v2017, %v2016
    %v2027 = vpack.c.b16 %v2019, %v2018
    %2036 = vmatpush.bf16.msra.mxu0 %v2027
    %2037 = vmatpush.bf16.msra.mxu0 %v2026
    %2038 = vmatpush.bf16.msra.mxu0 %v2025
    %2039 = vmatpush.bf16.msra.mxu0 %v2024
    %2040 = vmatpush.bf16.msra.mxu0 %v2023
    %2041 = vmatpush.bf16.msra.mxu0 %v2022
    %2042 = vmatpush.bf16.msra.mxu0 %v2021
    %2043 = vmatpush.bf16.msra.mxu0 %v2020
    %2044 = vmatmul.bf16.gmra.mxu0 %v1444
    %v2045 = vpop.f32.mrf.mxu0
    %v2046 = vadd.f32 0.0, %v2045
    %v2047 = vpop.f32.mrf.mxu0
    %2048 = vdwg.mxu0
    %v2065 = vunpack.c.l.b16 %v1956
    %v2066 = vunpack.c.l.b16 %v1957
    %v2067 = vunpack.c.l.b16 %v1958
    %v2068 = vunpack.c.l.b16 %v1959
    %v2069 = vunpack.c.l.b16 %v1960
    %v2070 = vunpack.c.l.b16 %v1961
    %v2071 = vunpack.c.l.b16 %v1962
    %v2072 = vunpack.c.l.b16 %v1963
    %v2073 = vunpack.c.l.b16 %v1964
    %v2074 = vunpack.c.l.b16 %v1965
    %v2075 = vunpack.c.l.b16 %v1966
    %v2076 = vunpack.c.l.b16 %v1967
    %v2077 = vunpack.c.l.b16 %v1968
    %v2078 = vunpack.c.l.b16 %v1969
    %v2079 = vunpack.c.l.b16 %v1970
    %v2080 = vunpack.c.l.b16 %v1971
    %v2081 = vpack.c.b16 %v2066, %v2065
    %v2082 = vpack.c.b16 %v2068, %v2067
    %v2083 = vpack.c.b16 %v2070, %v2069
    %v2084 = vpack.c.b16 %v2072, %v2071
    %v2085 = vpack.c.b16 %v2074, %v2073
    %v2086 = vpack.c.b16 %v2076, %v2075
    %v2087 = vpack.c.b16 %v2078, %v2077
    %v2088 = vpack.c.b16 %v2080, %v2079
    %2097 = vmatpush.bf16.msra.mxu0 %v2088
    %2098 = vmatpush.bf16.msra.mxu0 %v2087
    %2099 = vmatpush.bf16.msra.mxu0 %v2086
    %2100 = vmatpush.bf16.msra.mxu0 %v2085
    %2101 = vmatpush.bf16.msra.mxu0 %v2084
    %2102 = vmatpush.bf16.msra.mxu0 %v2083
    %2103 = vmatpush.bf16.msra.mxu0 %v2082
    %2104 = vmatpush.bf16.msra.mxu0 %v2081
    %2105 = vmatmul.bf16.gmra.mxu0 %v832
    %v2106 = vpop.f32.mrf.mxu0
    %v2107 = vadd.f32 %v2046, %v2106
    %v2108 = vpop.f32.mrf.mxu0
    %2109 = vdwg.mxu0
    %v2110 = vld [vmem:[#allocation2 + $0x80] sm:$0xf]
    %v2111 = vld [vmem:[#allocation2 + $0x84] sm:$0xf]
    %v2112 = vld [vmem:[#allocation2 + $0x88] sm:$0xf]
    %v2113 = vld [vmem:[#allocation2 + $0x8c] sm:$0xf]
    %v2114 = vld [vmem:[#allocation2 + $0x90] sm:$0xf]
    %v2115 = vld [vmem:[#allocation2 + $0x94] sm:$0xf]
    %v2116 = vld [vmem:[#allocation2 + $0x98] sm:$0xf]
    %v2117 = vld [vmem:[#allocation2 + $0x9c] sm:$0xf]
    %v2118 = vld [vmem:[#allocation2 + $0xa0] sm:$0xf]
    %v2119 = vld [vmem:[#allocation2 + $0xa4] sm:$0xf]
    %v2120 = vld [vmem:[#allocation2 + $0xa8] sm:$0xf]
    %v2121 = vld [vmem:[#allocation2 + $0xac] sm:$0xf]
    %v2122 = vld [vmem:[#allocation2 + $0xb0] sm:$0xf]
    %v2123 = vld [vmem:[#allocation2 + $0xb4] sm:$0xf]
    %v2124 = vld [vmem:[#allocation2 + $0xb8] sm:$0xf]
    %v2125 = vld [vmem:[#allocation2 + $0xbc] sm:$0xf]
    %v2142 = vunpack.c.l.b16 %v2110
    %v2143 = vunpack.c.l.b16 %v2111
    %v2144 = vunpack.c.l.b16 %v2112
    %v2145 = vunpack.c.l.b16 %v2113
    %v2146 = vunpack.c.l.b16 %v2114
    %v2147 = vunpack.c.l.b16 %v2115
    %v2148 = vunpack.c.l.b16 %v2116
    %v2149 = vunpack.c.l.b16 %v2117
    %v2150 = vunpack.c.l.b16 %v2118
    %v2151 = vunpack.c.l.b16 %v2119
    %v2152 = vunpack.c.l.b16 %v2120
    %v2153 = vunpack.c.l.b16 %v2121
    %v2154 = vunpack.c.l.b16 %v2122
    %v2155 = vunpack.c.l.b16 %v2123
    %v2156 = vunpack.c.l.b16 %v2124
    %v2157 = vunpack.c.l.b16 %v2125
    %v2158 = vpack.c.b16 %v2143, %v2142
    %v2159 = vpack.c.b16 %v2145, %v2144
    %v2160 = vpack.c.b16 %v2147, %v2146
    %v2161 = vpack.c.b16 %v2149, %v2148
    %v2162 = vpack.c.b16 %v2151, %v2150
    %v2163 = vpack.c.b16 %v2153, %v2152
    %v2164 = vpack.c.b16 %v2155, %v2154
    %v2165 = vpack.c.b16 %v2157, %v2156
    %2174 = vmatpush.bf16.msra.mxu0 %v2165
    %2175 = vmatpush.bf16.msra.mxu0 %v2164
    %2176 = vmatpush.bf16.msra.mxu0 %v2163
    %2177 = vmatpush.bf16.msra.mxu0 %v2162
    %2178 = vmatpush.bf16.msra.mxu0 %v2161
    %2179 = vmatpush.bf16.msra.mxu0 %v2160
    %2180 = vmatpush.bf16.msra.mxu0 %v2159
    %2181 = vmatpush.bf16.msra.mxu0 %v2158
    %2182 = vmatmul.bf16.gmra.mxu0 %v1951
    %v2183 = vpop.f32.mrf.mxu0
    %v2184 = vadd.f32 0.0, %v2183
    %v2185 = vpop.f32.mrf.mxu0
    %2186 = vdwg.mxu0
    %v2187 = vadd.f32 %v2107, %v2184
    %v2188 = vld [vmem:[%s833 + $0x4] sm:$0x1]
    %v2189 = vadd.f32 %v2187, %v2188
    %v2190 = vmax.f32 %v2189, 0.0
    %v2191 = vpack.c.bf16 %v2190, %v2190
    %v2192 = vld [vmem:[#allocation2 + $0xc0] sm:$0xf]
    %v2193 = vld [vmem:[#allocation2 + $0xc4] sm:$0xf]
    %v2194 = vld [vmem:[#allocation2 + $0xc8] sm:$0xf]
    %v2195 = vld [vmem:[#allocation2 + $0xcc] sm:$0xf]
    %v2196 = vld [vmem:[#allocation2 + $0xd0] sm:$0xf]
    %v2197 = vld [vmem:[#allocation2 + $0xd4] sm:$0xf]
    %v2198 = vld [vmem:[#allocation2 + $0xd8] sm:$0xf]
    %v2199 = vld [vmem:[#allocation2 + $0xdc] sm:$0xf]
    %v2200 = vld [vmem:[#allocation2 + $0xe0] sm:$0xf]
    %v2201 = vld [vmem:[#allocation2 + $0xe4] sm:$0xf]
    %v2202 = vld [vmem:[#allocation2 + $0xe8] sm:$0xf]
    %v2203 = vld [vmem:[#allocation2 + $0xec] sm:$0xf]
    %v2204 = vld [vmem:[#allocation2 + $0xf0] sm:$0xf]
    %v2205 = vld [vmem:[#allocation2 + $0xf4] sm:$0xf]
    %v2206 = vld [vmem:[#allocation2 + $0xf8] sm:$0xf]
    %v2207 = vld [vmem:[#allocation2 + $0xfc] sm:$0xf]
    %v2208 = vld [vmem:[%s1445 + $0x4] sm:$0x1]
    %v2225 = vunpack.c.l.b16 %v2192
    %v2226 = vunpack.c.l.b16 %v2193
    %v2227 = vunpack.c.l.b16 %v2194
    %v2228 = vunpack.c.l.b16 %v2195
    %v2229 = vunpack.c.l.b16 %v2196
    %v2230 = vunpack.c.l.b16 %v2197
    %v2231 = vunpack.c.l.b16 %v2198
    %v2232 = vunpack.c.l.b16 %v2199
    %v2233 = vunpack.c.l.b16 %v2200
    %v2234 = vunpack.c.l.b16 %v2201
    %v2235 = vunpack.c.l.b16 %v2202
    %v2236 = vunpack.c.l.b16 %v2203
    %v2237 = vunpack.c.l.b16 %v2204
    %v2238 = vunpack.c.l.b16 %v2205
    %v2239 = vunpack.c.l.b16 %v2206
    %v2240 = vunpack.c.l.b16 %v2207
    %v2241 = vpack.c.b16 %v2226, %v2225
    %v2242 = vpack.c.b16 %v2228, %v2227
    %v2243 = vpack.c.b16 %v2230, %v2229
    %v2244 = vpack.c.b16 %v2232, %v2231
    %v2245 = vpack.c.b16 %v2234, %v2233
    %v2246 = vpack.c.b16 %v2236, %v2235
    %v2247 = vpack.c.b16 %v2238, %v2237
    %v2248 = vpack.c.b16 %v2240, %v2239
    %2257 = vmatpush.bf16.msra.mxu0 %v2248
    %2258 = vmatpush.bf16.msra.mxu0 %v2247
    %2259 = vmatpush.bf16.msra.mxu0 %v2246
    %2260 = vmatpush.bf16.msra.mxu0 %v2245
    %2261 = vmatpush.bf16.msra.mxu0 %v2244
    %2262 = vmatpush.bf16.msra.mxu0 %v2243
    %2263 = vmatpush.bf16.msra.mxu0 %v2242
    %2264 = vmatpush.bf16.msra.mxu0 %v2241
    %2265 = vmatmul.bf16.gmra.mxu0 %v2191
    %v2266 = vpop.f32.mrf.mxu0
    %v2267 = vadd.f32 %v2208, %v2266
    %v2268 = vpop.f32.mrf.mxu0
    %2269 = vdwg.mxu0
    %2270 = vst [vmem:[#allocation12] sm:$0x1] %v2267
    // Predicated region
    $region38: #{pkanet_forward.1} parent=1 // pred_check
      _
    $region39: #{pkanet_forward.1} parent=1 // pred_check_branch
      %2272 = sbr.rel (0) target = $region41
    $region40: #{pkanet_forward.1} parent=1 // pred_region
      %2274 = vsyncadd [#allocation6], 0
      %s2276 = sshll.u32 [#allocation12], 4
      %s2277 = int_to_ptr.vmem [resolvable:$true] %s2276
      %s2278 = sshll.u32 %s5, 4
      %s2279 = int_to_ptr.hbm [resolvable:$true] %s2278
      %2281 = dma.vmem_to_hbm [thread:$0]  %s2277, 16, %s2279, [#allocation6]
    $region41: #{pkanet_forward.1} parent=1 // pred_fallthru
      _
    // Predicated region
    $region42: #{pkanet_forward.1} parent=1 // pred_check
      _
    $region43: #{pkanet_forward.1} parent=1 // pred_check_branch
      %2283 = sbr.rel (0) target = $region45
    $region44: #{pkanet_forward.1} parent=1 // pred_region
      %2285 = dma.done [#allocation6], 16
    $region45: #{pkanet_forward.1} parent=1 // pred_fallthru
      _
    %2286 = vsyncpa [#allocation5], 1
    %2287 = vsyncpa [#allocation8], 1
    %2288 = vsyncpa [#allocation11], 1
    %2289 = vsyncpa [#allocation6], 1
  %2290 = vsyncmov [#allocation3]
  %s2291 = vpop.sfrf %2290
  %p2292 = scmp.eq.s32.totalorder %s2291, 0
  %p2293 = pneg %p2292
  %2295 = shalt.err (%p2293)

</llo_original>
